<compile_context>
chip_gen: v5e
topology: v5e:2x2
jax: 0.10.0
libtpu: 0.0.40
codegen_flags: <defaults>
</compile_context>

<pallas_src>
import functools

import jax
import jax.numpy as jnp
from jax.experimental import pallas as pl
from jax.experimental.pallas import tpu as pltpu


NUM_LAYERS = 5
BN_EPS = 1e-5
LEAKY_SLOPE = 0.2
PAD_F = 128                       # lane-dense padded feature width
STREAM_TM_CAP = 512               # streamed-A row tile cap
STREAM_TK_CAP = 2048              # streamed-A reduction tile cap (bigger tiles -> less per-step overhead)


# ----------------------------------------------------------------------------- small helpers


def _round_up(n, m):
    return ((n + m - 1) // m) * m


def _vmem_budget_bytes():
    """Per-chip VMEM budget with headroom (v7x: ~48 MiB, v5e/v6e: ~96 MiB)."""
    cap = None
    try:
        info = pltpu.get_tpu_info()
        cap = getattr(info, "vmem_capacity_bytes", None)
    except Exception:
        cap = None
    if not cap:
        cap = 64 * 1024 * 1024          # conservative fallback (v7x-sized)
    return int(min(cap * 3 // 4, 100 * 1024 * 1024))


def _fused_vmem_estimate(n_pad):
    """Conservative VMEM footprint of the fused kernel (includes a possible compiler copy of A)."""
    a_bytes = 2 * n_pad * n_pad * 2                                   # resident A (+ safety copy)
    x_bytes = 10 * n_pad * PAD_F * 4                                  # in/out blocks + f32/bf16 temps
    w_bytes = (NUM_LAYERS + 1) * (PAD_F * PAD_F * 2 + 3 * PAD_F * 4)  # W stack + vec stack
    return a_bytes + x_bytes + w_bytes + (2 << 20)


def _fit_tile(n_pad, cap):
    """Largest multiple of 128 <= cap that divides n_pad (n_pad is a multiple of 128)."""
    t = min(cap, n_pad)
    t = max(PAD_F, (t // PAD_F) * PAD_F)
    while n_pad % t:
        t -= PAD_F
    return t


def _pick_tiles(n_pad):
    tm = _fit_tile(n_pad, STREAM_TM_CAP)
    # v7x megacore: make sure the "parallel" row axis has >= 2 blocks when possible.
    if n_pad // tm < 2 and n_pad >= 2 * PAD_F:
        tm = _fit_tile(n_pad, n_pad // 2)
    tk = _fit_tile(n_pad, STREAM_TK_CAP)
    return tm, tk


# ----------------------------------------------------------------------------- fused kernel (A resident)


def fused_gnn_kernel(a_ref, x_ref, w_ref, vec_ref, out_ref):
    """All 6 GCN layers in one kernel; A_hat / X / weights resident in VMEM."""
    a = a_ref[...]                                   # (N_pad, N_pad) bf16
    x = x_ref[...]                                   # (N_pad, 128)   bf16
    for l in range(NUM_LAYERS):
        v = vec_ref[l]                               # (3, 128) f32: [bias, bn_scale, bn_shift]
        # XW = X @ W^T  (bf16 operands, f32 accumulation), rounded to bf16 for the aggregation.
        xw = jnp.dot(x, w_ref[l], preferred_element_type=jnp.float32).astype(jnp.bfloat16)
        # H = A_hat @ XW + b   (f32 accumulation)
        h = jnp.dot(a, xw, preferred_element_type=jnp.float32)
        h = h + v[0:1, :]
        h = jnp.where(h > 0, h, LEAKY_SLOPE * h)     # LeakyReLU(0.2)
        h = h * v[1:2, :] + v[2:3, :]                # BatchNorm1d (eval) folded into scale/shift
        # Dropout(0.5) -> identity in eval; residual add.
        x = (h + x.astype(jnp.float32)).astype(jnp.bfloat16)
    # Output GCN layer: dx = A_hat @ (X @ Wout^T) + bout   (f32 output)
    xw = jnp.dot(x, w_ref[NUM_LAYERS], preferred_element_type=jnp.float32).astype(jnp.bfloat16)
    dx = jnp.dot(a, xw, preferred_element_type=jnp.float32)
    out_ref[...] = dx + vec_ref[NUM_LAYERS][0:1, :]


@functools.partial(jax.jit, static_argnames=("vmem_limit",))
def _fused_forward(x, a_pad, w_stack, vec_stack, vmem_limit):
    n, hdim = x.shape
    n_pad = a_pad.shape[0]
    x_p = jnp.zeros((n_pad, PAD_F), jnp.bfloat16).at[:n, :hdim].set(x.astype(jnp.bfloat16))
    return pl.pallas_call(
        fused_gnn_kernel,
        out_shape=jax.ShapeDtypeStruct((n_pad, PAD_F), jnp.float32),
        grid_spec=pltpu.PrefetchScalarGridSpec(
            num_scalar_prefetch=0,
            grid=(1,),
            in_specs=[
                pl.BlockSpec((n_pad, n_pad), lambda i: (0, 0)),                    # A_hat (resident)
                pl.BlockSpec((n_pad, PAD_F), lambda i: (0, 0)),                    # X
                pl.BlockSpec((NUM_LAYERS + 1, PAD_F, PAD_F), lambda i: (0, 0, 0)),  # stacked W^T
                pl.BlockSpec((NUM_LAYERS + 1, 3, PAD_F), lambda i: (0, 0, 0)),      # stacked bias/bn
            ],
            out_specs=pl.BlockSpec((n_pad, PAD_F), lambda i: (0, 0)),
        ),
        compiler_params=pltpu.CompilerParams(
            dimension_semantics=("arbitrary",),
            vmem_limit_bytes=vmem_limit,
        ),
    )(a_pad, x_p, w_stack, vec_stack)


# ----------------------------------------------------------------------------- streamed fallback (large N)


def _stream_kernel(*refs, is_output):
    if is_output:
        x_k_ref, a_ref, w_ref, vec_ref, out_ref, acc_ref = refs
        resid_ref = None
    else:
        x_k_ref, a_ref, resid_ref, w_ref, vec_ref, out_ref, acc_ref = refs
    k = pl.program_id(1)

    @pl.when(k == 0)
    def _():
        acc_ref[...] = jnp.zeros_like(acc_ref)

    # XW_k first (keeps the aggregated result in f32); the redundant per-row-tile XW matmul is
    # hidden under the HBM-bound A_hat stream.
    xw_k = jnp.dot(x_k_ref[...], w_ref[...],
                   preferred_element_type=jnp.float32).astype(jnp.bfloat16)
    acc_ref[...] += jnp.dot(a_ref[...], xw_k, preferred_element_type=jnp.float32)

    @pl.when(k == pl.num_programs(1) - 1)
    def _():
        v = vec_ref[...]
        h = acc_ref[...] + v[0:1, :]
        if not is_output:
            h = jnp.where(h > 0, h, LEAKY_SLOPE * h)           # LeakyReLU(0.2)
            h = h * v[1:2, :] + v[2:3, :]                      # BatchNorm1d (eval, folded)
            h = h + resid_ref[...].astype(jnp.float32)         # Dropout=identity; residual add
        out_ref[...] = h.astype(out_ref.dtype)


def _stream_layer(x_p, a_p, w, vec, *, is_output, tm, tk, vmem_limit):
    n_pad = x_p.shape[0]
    grid = (n_pad // tm, n_pad // tk)
    out_dtype = jnp.float32 if is_output else jnp.bfloat16

    in_specs = [
        pl.BlockSpec((tk, PAD_F), lambda i, k: (k, 0)),        # X k-slice (aggregation input)
        pl.BlockSpec((tm, tk), lambda i, k: (i, k)),           # A_hat tile (streamed)
    ]
    operands = [x_p, a_p]
    if not is_output:
        in_specs.append(pl.BlockSpec((tm, PAD_F), lambda i, k: (i, 0)))   # residual rows
        operands.append(x_p)
    in_specs += [
        pl.BlockSpec((PAD_F, PAD_F), lambda i, k: (0, 0)),     # W^T (resident)
        pl.BlockSpec((3, PAD_F), lambda i, k: (0, 0)),         # packed bias/bn vec (resident)
    ]
    operands += [w, vec]

    kernel = functools.partial(_stream_kernel, is_output=is_output)
    return pl.pallas_call(
        kernel,
        out_shape=jax.ShapeDtypeStruct((n_pad, PAD_F), out_dtype),
        grid_spec=pltpu.PrefetchScalarGridSpec(
            num_scalar_prefetch=0,
            grid=grid,
            in_specs=in_specs,
            out_specs=pl.BlockSpec((tm, PAD_F), lambda i, k: (i, 0)),
            scratch_shapes=[pltpu.VMEM((tm, PAD_F), jnp.float32)],
        ),
        compiler_params=pltpu.CompilerParams(
            dimension_semantics=("parallel", "arbitrary"),
            vmem_limit_bytes=vmem_limit,
        ),
    )(*operands)


@functools.partial(jax.jit, static_argnames=("tm", "tk", "vmem_limit"))
def _streamed_forward(x, a_pad, w_stack, vec_stack, tm, tk, vmem_limit):
    n, hdim = x.shape
    n_pad = a_pad.shape[0]
    x_p = jnp.zeros((n_pad, PAD_F), jnp.bfloat16).at[:n, :hdim].set(x.astype(jnp.bfloat16))
    for l in range(NUM_LAYERS):
        x_p = _stream_layer(x_p, a_pad, w_stack[l], vec_stack[l],
                            is_output=False, tm=tm, tk=tk, vmem_limit=vmem_limit)
    return _stream_layer(x_p, a_pad, w_stack[NUM_LAYERS], vec_stack[NUM_LAYERS],
                         is_output=True, tm=tm, tk=tk, vmem_limit=vmem_limit)


# ----------------------------------------------------------------------------- public forward


def deformation_gnn_forward(x, a_pad, kparams, *, force_streamed=False):
    """x: (N, H) f32; a_pad: (N_pad, N_pad) bf16 padded gcn_norm adjacency (from pad_adjacency).

    Returns (N, 128) f32 lane-dense output; real deformation is the first output_dim columns.
    """
    n = x.shape[0]
    n_pad = a_pad.shape[0]
    budget = _vmem_budget_bytes()
    if (not force_streamed) and _fused_vmem_estimate(n_pad) <= budget:
        out = _fused_forward(x, a_pad, kparams["w_stack"], kparams["vec_stack"],
                             vmem_limit=budget)
    else:
        tm, tk = _pick_tiles(n_pad)
        out = _streamed_forward(x, a_pad, kparams["w_stack"], kparams["vec_stack"],
                                tm=tm, tk=tk, vmem_limit=budget)
    return out[:n, :]


# ----------------------------------------------------------------------------- host-side prep


def build_gcn_adjacency(edge_index, num_nodes):
    """Dense PyG-style gcn_norm adjacency: self-loops + symmetric deg^{-1/2} normalization."""
    src = jnp.concatenate([edge_index[0], jnp.arange(num_nodes)])
    dst = jnp.concatenate([edge_index[1], jnp.arange(num_nodes)])
    ones = jnp.ones(src.shape[0], dtype=jnp.float32)
    deg = jnp.zeros((num_nodes,), dtype=jnp.float32).at[dst].add(ones)
    deg_inv_sqrt = jnp.where(deg > 0, 1.0 / jnp.sqrt(deg), 0.0)
    norm = deg_inv_sqrt[src] * deg_inv_sqrt[dst]
    return jnp.zeros((num_nodes, num_nodes), jnp.float32).at[dst, src].add(norm)


def pad_adjacency(a_hat):
    """One-time: cast A_hat to bf16 and zero-pad N to a multiple of 128 (lane-dense, square)."""
    n = a_hat.shape[0]
    n_pad = max(PAD_F, _round_up(n, PAD_F))
    return jnp.zeros((n_pad, n_pad), jnp.bfloat16).at[:n, :n].set(a_hat.astype(jnp.bfloat16))


def init_raw_params(key, hidden, out_dim, num_layers):
    """Synthetic f32 parameters in PyTorch layout (W applied as x @ W^T)."""
    keys = jax.random.split(key, 2 * num_layers + 2)
    scale = jnp.sqrt(2.0 / (hidden + hidden))
    w = jnp.stack([scale * jax.random.normal(keys[2 * l], (hidden, hidden), jnp.float32)
                   for l in range(num_layers)])
    b = jnp.stack([0.01 * jax.random.normal(keys[2 * l + 1], (hidden,), jnp.float32)
                   for l in range(num_layers)])
    gamma = jnp.ones((num_layers, hidden), jnp.float32)
    beta = jnp.zeros((num_layers, hidden), jnp.float32)
    rmean = jnp.zeros((num_layers, hidden), jnp.float32)
    rvar = jnp.ones((num_layers, hidden), jnp.float32)
    scale_o = jnp.sqrt(2.0 / (hidden + out_dim))
    wout = scale_o * jax.random.normal(keys[-2], (out_dim, hidden), jnp.float32)
    bout = 0.01 * jax.random.normal(keys[-1], (out_dim,), jnp.float32)
    return {"w": w, "b": b, "gamma": gamma, "beta": beta, "rmean": rmean, "rvar": rvar,
            "wout": wout, "bout": bout}


def prepare_kernel_params(raw, hidden, out_dim):
    """Pad to lane-dense 128, fold BN eval affine, stack all 6 layers, cast matmul operands to bf16."""
    nl = raw["w"].shape[0]
    w_stack = jnp.zeros((nl + 1, PAD_F, PAD_F), jnp.bfloat16)
    w_stack = w_stack.at[:nl, :hidden, :hidden].set(
        jnp.transpose(raw["w"], (0, 2, 1)).astype(jnp.bfloat16))
    w_stack = w_stack.at[nl, :hidden, :out_dim].set(raw["wout"].T.astype(jnp.bfloat16))

    bn_scale = raw["gamma"] * jax.lax.rsqrt(raw["rvar"] + BN_EPS)
    bn_shift = raw["beta"] - raw["rmean"] * bn_scale
    vec_stack = jnp.zeros((nl + 1, 3, PAD_F), jnp.float32)
    vec_stack = vec_stack.at[:nl, 0, :hidden].set(raw["b"])
    vec_stack = vec_stack.at[:nl, 1, :hidden].set(bn_scale)
    vec_stack = vec_stack.at[:nl, 2, :hidden].set(bn_shift)
    vec_stack = vec_stack.at[nl, 0, :out_dim].set(raw["bout"])
    return {"w_stack": w_stack, "vec_stack": vec_stack}


def reference_forward(x, a_hat, raw):
    """Pure-JAX f32 reference with original module semantics (eval mode)."""
    h = x
    for l in range(NUM_LAYERS):
        res = h
        z = a_hat @ (h @ raw["w"][l].T) + raw["b"][l]
        z = jnp.where(z > 0, z, LEAKY_SLOPE * z)
        z = (z - raw["rmean"][l]) * jax.lax.rsqrt(raw["rvar"][l] + BN_EPS) * raw["gamma"][l] \
            + raw["beta"][l]
        h = z + res
    return a_hat @ (h @ raw["wout"].T) + raw["bout"]


# ----------------------------------------------------------------------------- demo


if __name__ == "__main__":
    # 64 nodes on a bidirectional ring graph; input == hidden == 32 (residual constraint),
    # output_dim = 3, num_layers = 5.
    N = 64
    HIDDEN = 32
    OUT = 3

    key = jax.random.PRNGKey(0)
    k_x, k_p = jax.random.split(key)

    x = jax.random.normal(k_x, (N, HIDDEN), jnp.float32)

    nodes = jnp.arange(N)
    edge_index = jnp.stack([
        jnp.concatenate([nodes, (nodes + 1) % N]),   # sources
        jnp.concatenate([(nodes + 1) % N, nodes]),   # targets
    ])                                               # (2, 2N)

    a_hat = build_gcn_adjacency(edge_index, N)
    a_pad = pad_adjacency(a_hat)                     # one-time cast/pad (hoisted out of forward)
    raw_params = init_raw_params(k_p, HIDDEN, OUT, NUM_LAYERS)
    kparams = prepare_kernel_params(raw_params, HIDDEN, OUT)

    ref = reference_forward(x, a_hat, raw_params)

    # Fused (A_hat resident in VMEM) path — the default for this problem size.
    dx_fused = deformation_gnn_forward(x, a_pad, kparams)
    jax.block_until_ready(dx_fused)
    dx = dx_fused[:, :OUT]
    assert dx.shape == (N, OUT), dx.shape
    assert dx.dtype == jnp.float32
    assert bool(jnp.all(jnp.isfinite(dx)))
    rel_err = jnp.linalg.norm(dx - ref) / (jnp.linalg.norm(ref) + 1e-6)
    assert float(rel_err) < 0.05, ("fused", float(rel_err))

    # Also exercise the streamed fallback path (used when A_hat does not fit VMEM).
    dx_stream = deformation_gnn_forward(x, a_pad, kparams, force_streamed=True)
    jax.block_until_ready(dx_stream)
    dx_s = dx_stream[:, :OUT]
    assert dx_s.shape == (N, OUT)
    assert bool(jnp.all(jnp.isfinite(dx_s)))
    rel_err_s = jnp.linalg.norm(dx_s - ref) / (jnp.linalg.norm(ref) + 1e-6)
    assert float(rel_err_s) < 0.05, ("streamed", float(rel_err_s))

    print("KERNEL_OK")
</pallas_src>

<mosaic_0001>
module attributes {stable_mosaic.version = 11 : i64} {
  func.func @fused_gnn_kernel(%arg0: i32, %arg1: memref<128x128xbf16, #tpu.memory_space<vmem>>, %arg2: memref<128x128xbf16, #tpu.memory_space<vmem>>, %arg3: memref<6x128x128xbf16, #tpu.memory_space<vmem>>, %arg4: memref<6x3x128xf32, #tpu.memory_space<vmem>>, %arg5: memref<128x128xf32, #tpu.memory_space<vmem>>) attributes {dimension_semantics = [#tpu.dimension_semantics<arbitrary>], iteration_bounds = array<i64: 1>, scalar_prefetch = 0 : i64, scratch_operands = 0 : i64, tpu.core_type = #tpu.core_type<tc>, window_params = [{pipeline_mode = #tpu.pipeline_mode<synchronous>, transform_indices = @transform_0, window_bounds = array<i64: 128, 128>}, {pipeline_mode = #tpu.pipeline_mode<synchronous>, transform_indices = @transform_1, window_bounds = array<i64: 128, 128>}, {pipeline_mode = #tpu.pipeline_mode<synchronous>, transform_indices = @transform_2, window_bounds = array<i64: 6, 128, 128>}, {pipeline_mode = #tpu.pipeline_mode<synchronous>, transform_indices = @transform_3, window_bounds = array<i64: 6, 3, 128>}, {pipeline_mode = #tpu.pipeline_mode<synchronous>, transform_indices = @transform_4, window_bounds = array<i64: 128, 128>}]} {
    %c0 = arith.constant 0 : index
    %c0_0 = arith.constant 0 : index
    %0 = vector.load %arg1[%c0, %c0_0] : memref<128x128xbf16, #tpu.memory_space<vmem>>, vector<128x128xbf16>
    %c0_1 = arith.constant 0 : index
    %c0_2 = arith.constant 0 : index
    %1 = vector.load %arg2[%c0_1, %c0_2] : memref<128x128xbf16, #tpu.memory_space<vmem>>, vector<128x128xbf16>
    %c0_3 = arith.constant 0 : index
    %c0_4 = arith.constant 0 : index
    %c0_5 = arith.constant 0 : index
    %2 = vector.load %arg4[%c0_3, %c0_4, %c0_5] : memref<6x3x128xf32, #tpu.memory_space<vmem>>, vector<1x3x128xf32>
    %3 = vector.shape_cast %2 : vector<1x3x128xf32> to vector<3x128xf32>
    %c0_6 = arith.constant 0 : index
    %c0_7 = arith.constant 0 : index
    %c0_8 = arith.constant 0 : index
    %4 = vector.load %arg3[%c0_6, %c0_7, %c0_8] : memref<6x128x128xbf16, #tpu.memory_space<vmem>>, vector<1x128x128xbf16>
    %5 = vector.shape_cast %4 : vector<1x128x128xbf16> to vector<128x128xbf16>
    %cst = arith.constant dense<0.000000e+00> : vector<128x128xf32>
    %6 = tpu.matmul %1, %5, %cst {dimension_numbers = #tpu.dot_dimension_numbers<[1], [0], [0], [1], [0, 0, 1, 1], [], []>} : vector<128x128xbf16>, vector<128x128xbf16>, vector<128x128xf32> -> vector<128x128xf32>
    %7 = arith.truncf %6 : vector<128x128xf32> to vector<128x128xbf16>
    %cst_9 = arith.constant dense<0.000000e+00> : vector<128x128xf32>
    %8 = tpu.matmul %0, %7, %cst_9 {dimension_numbers = #tpu.dot_dimension_numbers<[1], [0], [0], [1], [0, 0, 1, 1], [], []>} : vector<128x128xbf16>, vector<128x128xbf16>, vector<128x128xf32> -> vector<128x128xf32>
    %9 = vector.extract_strided_slice %3 {offsets = [0, 0], sizes = [1, 128], strides = [1, 1]} : vector<3x128xf32> to vector<1x128xf32>
    %10 = vector.broadcast %9 : vector<1x128xf32> to vector<128x128xf32>
    %11 = arith.addf %8, %10 : vector<128x128xf32>
    %cst_10 = arith.constant 0.000000e+00 : f32
    %12 = vector.broadcast %cst_10 : f32 to vector<128x128xf32>
    %13 = arith.cmpf ogt, %11, %12 : vector<128x128xf32>
    %cst_11 = arith.constant 2.000000e-01 : f32
    %14 = vector.broadcast %cst_11 : f32 to vector<128x128xf32>
    %15 = arith.mulf %14, %11 : vector<128x128xf32>
    %16 = arith.select %13, %11, %15 : vector<128x128xi1>, vector<128x128xf32>
    %17 = vector.extract_strided_slice %3 {offsets = [1, 0], sizes = [1, 128], strides = [1, 1]} : vector<3x128xf32> to vector<1x128xf32>
    %18 = vector.broadcast %17 : vector<1x128xf32> to vector<128x128xf32>
    %19 = arith.mulf %16, %18 : vector<128x128xf32>
    %20 = vector.extract_strided_slice %3 {offsets = [2, 0], sizes = [1, 128], strides = [1, 1]} : vector<3x128xf32> to vector<1x128xf32>
    %21 = vector.broadcast %20 : vector<1x128xf32> to vector<128x128xf32>
    %22 = arith.addf %19, %21 : vector<128x128xf32>
    %23 = arith.extf %1 : vector<128x128xbf16> to vector<128x128xf32>
    %24 = arith.addf %22, %23 : vector<128x128xf32>
    %25 = arith.truncf %24 : vector<128x128xf32> to vector<128x128xbf16>
    %c1 = arith.constant 1 : index
    %c0_12 = arith.constant 0 : index
    %c0_13 = arith.constant 0 : index
    %26 = vector.load %arg4[%c1, %c0_12, %c0_13] : memref<6x3x128xf32, #tpu.memory_space<vmem>>, vector<1x3x128xf32>
    %27 = vector.shape_cast %26 : vector<1x3x128xf32> to vector<3x128xf32>
    %c1_14 = arith.constant 1 : index
    %c0_15 = arith.constant 0 : index
    %c0_16 = arith.constant 0 : index
    %28 = vector.load %arg3[%c1_14, %c0_15, %c0_16] : memref<6x128x128xbf16, #tpu.memory_space<vmem>>, vector<1x128x128xbf16>
    %29 = vector.shape_cast %28 : vector<1x128x128xbf16> to vector<128x128xbf16>
    %cst_17 = arith.constant dense<0.000000e+00> : vector<128x128xf32>
    %30 = tpu.matmul %25, %29, %cst_17 {dimension_numbers = #tpu.dot_dimension_numbers<[1], [0], [0], [1], [0, 0, 1, 1], [], []>} : vector<128x128xbf16>, vector<128x128xbf16>, vector<128x128xf32> -> vector<128x128xf32>
    %31 = arith.truncf %30 : vector<128x128xf32> to vector<128x128xbf16>
    %cst_18 = arith.constant dense<0.000000e+00> : vector<128x128xf32>
    %32 = tpu.matmul %0, %31, %cst_18 {dimension_numbers = #tpu.dot_dimension_numbers<[1], [0], [0], [1], [0, 0, 1, 1], [], []>} : vector<128x128xbf16>, vector<128x128xbf16>, vector<128x128xf32> -> vector<128x128xf32>
    %33 = vector.extract_strided_slice %27 {offsets = [0, 0], sizes = [1, 128], strides = [1, 1]} : vector<3x128xf32> to vector<1x128xf32>
    %34 = vector.broadcast %33 : vector<1x128xf32> to vector<128x128xf32>
    %35 = arith.addf %32, %34 : vector<128x128xf32>
    %cst_19 = arith.constant 0.000000e+00 : f32
    %36 = vector.broadcast %cst_19 : f32 to vector<128x128xf32>
    %37 = arith.cmpf ogt, %35, %36 : vector<128x128xf32>
    %cst_20 = arith.constant 2.000000e-01 : f32
    %38 = vector.broadcast %cst_20 : f32 to vector<128x128xf32>
    %39 = arith.mulf %38, %35 : vector<128x128xf32>
    %40 = arith.select %37, %35, %39 : vector<128x128xi1>, vector<128x128xf32>
    %41 = vector.extract_strided_slice %27 {offsets = [1, 0], sizes = [1, 128], strides = [1, 1]} : vector<3x128xf32> to vector<1x128xf32>
    %42 = vector.broadcast %41 : vector<1x128xf32> to vector<128x128xf32>
    %43 = arith.mulf %40, %42 : vector<128x128xf32>
    %44 = vector.extract_strided_slice %27 {offsets = [2, 0], sizes = [1, 128], strides = [1, 1]} : vector<3x128xf32> to vector<1x128xf32>
    %45 = vector.broadcast %44 : vector<1x128xf32> to vector<128x128xf32>
    %46 = arith.addf %43, %45 : vector<128x128xf32>
    %47 = arith.extf %25 : vector<128x128xbf16> to vector<128x128xf32>
    %48 = arith.addf %46, %47 : vector<128x128xf32>
    %49 = arith.truncf %48 : vector<128x128xf32> to vector<128x128xbf16>
    %c2 = arith.constant 2 : index
    %c0_21 = arith.constant 0 : index
    %c0_22 = arith.constant 0 : index
    %50 = vector.load %arg4[%c2, %c0_21, %c0_22] : memref<6x3x128xf32, #tpu.memory_space<vmem>>, vector<1x3x128xf32>
    %51 = vector.shape_cast %50 : vector<1x3x128xf32> to vector<3x128xf32>
    %c2_23 = arith.constant 2 : index
    %c0_24 = arith.constant 0 : index
    %c0_25 = arith.constant 0 : index
    %52 = vector.load %arg3[%c2_23, %c0_24, %c0_25] : memref<6x128x128xbf16, #tpu.memory_space<vmem>>, vector<1x128x128xbf16>
    %53 = vector.shape_cast %52 : vector<1x128x128xbf16> to vector<128x128xbf16>
    %cst_26 = arith.constant dense<0.000000e+00> : vector<128x128xf32>
    %54 = tpu.matmul %49, %53, %cst_26 {dimension_numbers = #tpu.dot_dimension_numbers<[1], [0], [0], [1], [0, 0, 1, 1], [], []>} : vector<128x128xbf16>, vector<128x128xbf16>, vector<128x128xf32> -> vector<128x128xf32>
    %55 = arith.truncf %54 : vector<128x128xf32> to vector<128x128xbf16>
    %cst_27 = arith.constant dense<0.000000e+00> : vector<128x128xf32>
    %56 = tpu.matmul %0, %55, %cst_27 {dimension_numbers = #tpu.dot_dimension_numbers<[1], [0], [0], [1], [0, 0, 1, 1], [], []>} : vector<128x128xbf16>, vector<128x128xbf16>, vector<128x128xf32> -> vector<128x128xf32>
    %57 = vector.extract_strided_slice %51 {offsets = [0, 0], sizes = [1, 128], strides = [1, 1]} : vector<3x128xf32> to vector<1x128xf32>
    %58 = vector.broadcast %57 : vector<1x128xf32> to vector<128x128xf32>
    %59 = arith.addf %56, %58 : vector<128x128xf32>
    %cst_28 = arith.constant 0.000000e+00 : f32
    %60 = vector.broadcast %cst_28 : f32 to vector<128x128xf32>
    %61 = arith.cmpf ogt, %59, %60 : vector<128x128xf32>
    %cst_29 = arith.constant 2.000000e-01 : f32
    %62 = vector.broadcast %cst_29 : f32 to vector<128x128xf32>
    %63 = arith.mulf %62, %59 : vector<128x128xf32>
    %64 = arith.select %61, %59, %63 : vector<128x128xi1>, vector<128x128xf32>
    %65 = vector.extract_strided_slice %51 {offsets = [1, 0], sizes = [1, 128], strides = [1, 1]} : vector<3x128xf32> to vector<1x128xf32>
    %66 = vector.broadcast %65 : vector<1x128xf32> to vector<128x128xf32>
    %67 = arith.mulf %64, %66 : vector<128x128xf32>
    %68 = vector.extract_strided_slice %51 {offsets = [2, 0], sizes = [1, 128], strides = [1, 1]} : vector<3x128xf32> to vector<1x128xf32>
    %69 = vector.broadcast %68 : vector<1x128xf32> to vector<128x128xf32>
    %70 = arith.addf %67, %69 : vector<128x128xf32>
    %71 = arith.extf %49 : vector<128x128xbf16> to vector<128x128xf32>
    %72 = arith.addf %70, %71 : vector<128x128xf32>
    %73 = arith.truncf %72 : vector<128x128xf32> to vector<128x128xbf16>
    %c3 = arith.constant 3 : index
    %c0_30 = arith.constant 0 : index
    %c0_31 = arith.constant 0 : index
    %74 = vector.load %arg4[%c3, %c0_30, %c0_31] : memref<6x3x128xf32, #tpu.memory_space<vmem>>, vector<1x3x128xf32>
    %75 = vector.shape_cast %74 : vector<1x3x128xf32> to vector<3x128xf32>
    %c3_32 = arith.constant 3 : index
    %c0_33 = arith.constant 0 : index
    %c0_34 = arith.constant 0 : index
    %76 = vector.load %arg3[%c3_32, %c0_33, %c0_34] : memref<6x128x128xbf16, #tpu.memory_space<vmem>>, vector<1x128x128xbf16>
    %77 = vector.shape_cast %76 : vector<1x128x128xbf16> to vector<128x128xbf16>
    %cst_35 = arith.constant dense<0.000000e+00> : vector<128x128xf32>
    %78 = tpu.matmul %73, %77, %cst_35 {dimension_numbers = #tpu.dot_dimension_numbers<[1], [0], [0], [1], [0, 0, 1, 1], [], []>} : vector<128x128xbf16>, vector<128x128xbf16>, vector<128x128xf32> -> vector<128x128xf32>
    %79 = arith.truncf %78 : vector<128x128xf32> to vector<128x128xbf16>
    %cst_36 = arith.constant dense<0.000000e+00> : vector<128x128xf32>
    %80 = tpu.matmul %0, %79, %cst_36 {dimension_numbers = #tpu.dot_dimension_numbers<[1], [0], [0], [1], [0, 0, 1, 1], [], []>} : vector<128x128xbf16>, vector<128x128xbf16>, vector<128x128xf32> -> vector<128x128xf32>
    %81 = vector.extract_strided_slice %75 {offsets = [0, 0], sizes = [1, 128], strides = [1, 1]} : vector<3x128xf32> to vector<1x128xf32>
    %82 = vector.broadcast %81 : vector<1x128xf32> to vector<128x128xf32>
    %83 = arith.addf %80, %82 : vector<128x128xf32>
    %cst_37 = arith.constant 0.000000e+00 : f32
    %84 = vector.broadcast %cst_37 : f32 to vector<128x128xf32>
    %85 = arith.cmpf ogt, %83, %84 : vector<128x128xf32>
    %cst_38 = arith.constant 2.000000e-01 : f32
    %86 = vector.broadcast %cst_38 : f32 to vector<128x128xf32>
    %87 = arith.mulf %86, %83 : vector<128x128xf32>
    %88 = arith.select %85, %83, %87 : vector<128x128xi1>, vector<128x128xf32>
    %89 = vector.extract_strided_slice %75 {offsets = [1, 0], sizes = [1, 128], strides = [1, 1]} : vector<3x128xf32> to vector<1x128xf32>
    %90 = vector.broadcast %89 : vector<1x128xf32> to vector<128x128xf32>
    %91 = arith.mulf %88, %90 : vector<128x128xf32>
    %92 = vector.extract_strided_slice %75 {offsets = [2, 0], sizes = [1, 128], strides = [1, 1]} : vector<3x128xf32> to vector<1x128xf32>
    %93 = vector.broadcast %92 : vector<1x128xf32> to vector<128x128xf32>
    %94 = arith.addf %91, %93 : vector<128x128xf32>
    %95 = arith.extf %73 : vector<128x128xbf16> to vector<128x128xf32>
    %96 = arith.addf %94, %95 : vector<128x128xf32>
    %97 = arith.truncf %96 : vector<128x128xf32> to vector<128x128xbf16>
    %c4 = arith.constant 4 : index
    %c0_39 = arith.constant 0 : index
    %c0_40 = arith.constant 0 : index
    %98 = vector.load %arg4[%c4, %c0_39, %c0_40] : memref<6x3x128xf32, #tpu.memory_space<vmem>>, vector<1x3x128xf32>
    %99 = vector.shape_cast %98 : vector<1x3x128xf32> to vector<3x128xf32>
    %c4_41 = arith.constant 4 : index
    %c0_42 = arith.constant 0 : index
    %c0_43 = arith.constant 0 : index
    %100 = vector.load %arg3[%c4_41, %c0_42, %c0_43] : memref<6x128x128xbf16, #tpu.memory_space<vmem>>, vector<1x128x128xbf16>
    %101 = vector.shape_cast %100 : vector<1x128x128xbf16> to vector<128x128xbf16>
    %cst_44 = arith.constant dense<0.000000e+00> : vector<128x128xf32>
    %102 = tpu.matmul %97, %101, %cst_44 {dimension_numbers = #tpu.dot_dimension_numbers<[1], [0], [0], [1], [0, 0, 1, 1], [], []>} : vector<128x128xbf16>, vector<128x128xbf16>, vector<128x128xf32> -> vector<128x128xf32>
    %103 = arith.truncf %102 : vector<128x128xf32> to vector<128x128xbf16>
    %cst_45 = arith.constant dense<0.000000e+00> : vector<128x128xf32>
    %104 = tpu.matmul %0, %103, %cst_45 {dimension_numbers = #tpu.dot_dimension_numbers<[1], [0], [0], [1], [0, 0, 1, 1], [], []>} : vector<128x128xbf16>, vector<128x128xbf16>, vector<128x128xf32> -> vector<128x128xf32>
    %105 = vector.extract_strided_slice %99 {offsets = [0, 0], sizes = [1, 128], strides = [1, 1]} : vector<3x128xf32> to vector<1x128xf32>
    %106 = vector.broadcast %105 : vector<1x128xf32> to vector<128x128xf32>
    %107 = arith.addf %104, %106 : vector<128x128xf32>
    %cst_46 = arith.constant 0.000000e+00 : f32
    %108 = vector.broadcast %cst_46 : f32 to vector<128x128xf32>
    %109 = arith.cmpf ogt, %107, %108 : vector<128x128xf32>
    %cst_47 = arith.constant 2.000000e-01 : f32
    %110 = vector.broadcast %cst_47 : f32 to vector<128x128xf32>
    %111 = arith.mulf %110, %107 : vector<128x128xf32>
    %112 = arith.select %109, %107, %111 : vector<128x128xi1>, vector<128x128xf32>
    %113 = vector.extract_strided_slice %99 {offsets = [1, 0], sizes = [1, 128], strides = [1, 1]} : vector<3x128xf32> to vector<1x128xf32>
    %114 = vector.broadcast %113 : vector<1x128xf32> to vector<128x128xf32>
    %115 = arith.mulf %112, %114 : vector<128x128xf32>
    %116 = vector.extract_strided_slice %99 {offsets = [2, 0], sizes = [1, 128], strides = [1, 1]} : vector<3x128xf32> to vector<1x128xf32>
    %117 = vector.broadcast %116 : vector<1x128xf32> to vector<128x128xf32>
    %118 = arith.addf %115, %117 : vector<128x128xf32>
    %119 = arith.extf %97 : vector<128x128xbf16> to vector<128x128xf32>
    %120 = arith.addf %118, %119 : vector<128x128xf32>
    %121 = arith.truncf %120 : vector<128x128xf32> to vector<128x128xbf16>
    %c5 = arith.constant 5 : index
    %c0_48 = arith.constant 0 : index
    %c0_49 = arith.constant 0 : index
    %122 = vector.load %arg3[%c5, %c0_48, %c0_49] : memref<6x128x128xbf16, #tpu.memory_space<vmem>>, vector<1x128x128xbf16>
    %123 = vector.shape_cast %122 : vector<1x128x128xbf16> to vector<128x128xbf16>
    %cst_50 = arith.constant dense<0.000000e+00> : vector<128x128xf32>
    %124 = tpu.matmul %121, %123, %cst_50 {dimension_numbers = #tpu.dot_dimension_numbers<[1], [0], [0], [1], [0, 0, 1, 1], [], []>} : vector<128x128xbf16>, vector<128x128xbf16>, vector<128x128xf32> -> vector<128x128xf32>
    %125 = arith.truncf %124 : vector<128x128xf32> to vector<128x128xbf16>
    %cst_51 = arith.constant dense<0.000000e+00> : vector<128x128xf32>
    %126 = tpu.matmul %0, %125, %cst_51 {dimension_numbers = #tpu.dot_dimension_numbers<[1], [0], [0], [1], [0, 0, 1, 1], [], []>} : vector<128x128xbf16>, vector<128x128xbf16>, vector<128x128xf32> -> vector<128x128xf32>
    %c5_52 = arith.constant 5 : index
    %c0_53 = arith.constant 0 : index
    %c0_54 = arith.constant 0 : index
    %127 = vector.load %arg4[%c5_52, %c0_53, %c0_54] : memref<6x3x128xf32, #tpu.memory_space<vmem>>, vector<1x3x128xf32>
    %128 = vector.shape_cast %127 : vector<1x3x128xf32> to vector<3x128xf32>
    %129 = vector.extract_strided_slice %128 {offsets = [0, 0], sizes = [1, 128], strides = [1, 1]} : vector<3x128xf32> to vector<1x128xf32>
    %130 = vector.broadcast %129 : vector<1x128xf32> to vector<128x128xf32>
    %131 = arith.addf %126, %130 : vector<128x128xf32>
    %c0_55 = arith.constant 0 : index
    %c0_56 = arith.constant 0 : index
    %132 = vector.load %arg5[%c0_55, %c0_56] : memref<128x128xf32, #tpu.memory_space<vmem>>, vector<128x128xf32>
    tpu.vector_store %arg5[%c0_55, %c0_56], %131 {strides = array<i32>} : memref<128x128xf32, #tpu.memory_space<vmem>>, vector<128x128xf32>,
    return
  }
  func.func @transform_0(%arg0: i32) -> (i32, i32) {
    %c0_i32 = arith.constant 0 : i32
    %c0_i32_0 = arith.constant 0 : i32
    %c0_i32_1 = arith.constant 0 : i32
    return %c0_i32, %c0_i32_0 : i32, i32
  }
  func.func @transform_1(%arg0: i32) -> (i32, i32) {
    %c0_i32 = arith.constant 0 : i32
    %c0_i32_0 = arith.constant 0 : i32
    %c0_i32_1 = arith.constant 0 : i32
    return %c0_i32, %c0_i32_0 : i32, i32
  }
  func.func @transform_2(%arg0: i32) -> (i32, i32, i32) {
    %c0_i32 = arith.constant 0 : i32
    %c0_i32_0 = arith.constant 0 : i32
    %c0_i32_1 = arith.constant 0 : i32
    %c0_i32_2 = arith.constant 0 : i32
    return %c0_i32, %c0_i32_0, %c0_i32_1 : i32, i32, i32
  }
  func.func @transform_3(%arg0: i32) -> (i32, i32, i32) {
    %c0_i32 = arith.constant 0 : i32
    %c0_i32_0 = arith.constant 0 : i32
    %c0_i32_1 = arith.constant 0 : i32
    %c0_i32_2 = arith.constant 0 : i32
    return %c0_i32, %c0_i32_0, %c0_i32_1 : i32, i32, i32
  }
  func.func @transform_4(%arg0: i32) -> (i32, i32) {
    %c0_i32 = arith.constant 0 : i32
    %c0_i32_0 = arith.constant 0 : i32
    %c0_i32_1 = arith.constant 0 : i32
    return %c0_i32, %c0_i32_0 : i32, i32
  }
}

</mosaic_0001>

<llo_original>
// kernel: _fused_forward.1
$region0: #{_fused_forward.1}
  #allocation0 [shape = 'u32[]', space=smem, size = 0x4, offset = 0x4, fixed_abs, tag = 'smem constant byte address 0x4 - core index']
  #allocation1 [shape = 'u32[72,128]{1,0:T(1,128)}', space=vmem, size = 0x9000, scoped, tag = 'internal scratch']
  %s0 = inlined_call_operand.vmem [shape: bf16[128,128], index: 0, kind: input, shape index: {}]
  %s1 = inlined_call_operand.vmem [shape: bf16[128,128], index: 1, kind: input, shape index: {}]
  %s2 = inlined_call_operand.hbm [shape: bf16[6,128,128], index: 2, kind: input, shape index: {}]
  %s3 = inlined_call_operand.vmem [shape: f32[6,3,128], index: 3, kind: input, shape index: {}]
  %s4 = inlined_call_operand.hbm [shape: f32[128,128], index: 4, kind: output, shape index: {}]
  %s5 = sld [smem:[#allocation0]]
  $region30: #{_fused_forward.1} parent=0
    _
  %s7 = ssub.s32 1, %s5
  %s8 = scalar_select 0, %s7, %s5
  $region1: #{_fused_forward.1} parent=0
    #allocation2 [shape = 'u8[196608]{0}', space=vmem, size = 0x30000, scoped, tag = 'input window, operand 2, single buffered']
    #allocation3 [shape = 's32[1]{0}', space=sflag, size = 0x4, scoped, tag = 'scoped memory for _fused_forward.1']
    #allocation4 [shape = 's32[1]{0}', space=sflag, size = 0x4, scoped, tag = 'scoped memory for _fused_forward.1']
    #allocation5 [shape = 'u8[65536]{0}', space=vmem, size = 0x10000, scoped, tag = 'output window, operand 0, single buffered']
    %9 = vsyncpa [#allocation3], 0
    %10 = vsyncpa [#allocation4], 0
    // Predicated region
    $region2: #{_fused_forward.1} parent=1 // pred_check
      _
    $region3: #{_fused_forward.1} parent=1 // pred_check_branch
      %12 = sbr.rel (0) target = $region5
    $region4: #{_fused_forward.1} parent=1 // pred_region
      _
    $region5: #{_fused_forward.1} parent=1 // pred_fallthru
      _
    // Predicated region
    $region6: #{_fused_forward.1} parent=1 // pred_check
      _
    $region7: #{_fused_forward.1} parent=1 // pred_check_branch
      %14 = sbr.rel (0) target = $region9
    $region8: #{_fused_forward.1} parent=1 // pred_region
      _
    $region9: #{_fused_forward.1} parent=1 // pred_fallthru
      _
    // Predicated region
    $region10: #{_fused_forward.1} parent=1 // pred_check
      _
    $region11: #{_fused_forward.1} parent=1 // pred_check_branch
      %16 = sbr.rel (0) target = $region13
    $region12: #{_fused_forward.1} parent=1 // pred_region
      %18 = vsyncadd [#allocation3], 0
      %s19 = sshll.u32 %s2, 4
      %s20 = int_to_ptr.hbm [resolvable:$true] %s19
      %s21 = sshll.u32 [#allocation2], 4
      %s22 = int_to_ptr.vmem [resolvable:$true] %s21
      %27 = dma.hbm_to_vmem [thread:$0]  %s20, 6144, %s22, [#allocation3], 64, 64, 4
    $region13: #{_fused_forward.1} parent=1 // pred_fallthru
      _
    // Predicated region
    $region14: #{_fused_forward.1} parent=1 // pred_check
      _
    $region15: #{_fused_forward.1} parent=1 // pred_check_branch
      %29 = sbr.rel (0) target = $region17
    $region16: #{_fused_forward.1} parent=1 // pred_region
      _
    $region17: #{_fused_forward.1} parent=1 // pred_fallthru
      _
    // Predicated region
    $region18: #{_fused_forward.1} parent=1 // pred_check
      _
    $region19: #{_fused_forward.1} parent=1 // pred_check_branch
      %31 = sbr.rel (0) target = $region21
    $region20: #{_fused_forward.1} parent=1 // pred_region
      %33 = dma.done [#allocation3], 6144
    $region21: #{_fused_forward.1} parent=1 // pred_fallthru
      _
    %v34 = vld [vmem:[%s0] sm:$0xf]
    %v35 = vld [vmem:[%s0 + $0x4] sm:$0xf]
    %v36 = vld [vmem:[%s0 + $0x8] sm:$0xf]
    %v37 = vld [vmem:[%s0 + $0xc] sm:$0xf]
    %v38 = vld [vmem:[%s0 + $0x10] sm:$0xf]
    %v39 = vld [vmem:[%s0 + $0x14] sm:$0xf]
    %v40 = vld [vmem:[%s0 + $0x18] sm:$0xf]
    %v41 = vld [vmem:[%s0 + $0x1c] sm:$0xf]
    %v42 = vld [vmem:[%s0 + $0x20] sm:$0xf]
    %v43 = vld [vmem:[%s0 + $0x24] sm:$0xf]
    %v44 = vld [vmem:[%s0 + $0x28] sm:$0xf]
    %v45 = vld [vmem:[%s0 + $0x2c] sm:$0xf]
    %v46 = vld [vmem:[%s0 + $0x30] sm:$0xf]
    %v47 = vld [vmem:[%s0 + $0x34] sm:$0xf]
    %v48 = vld [vmem:[%s0 + $0x38] sm:$0xf]
    %v49 = vld [vmem:[%s0 + $0x3c] sm:$0xf]
    %v50 = vld [vmem:[%s1] sm:$0xf]
    %v51 = vld [vmem:[%s1 + $0x4] sm:$0xf]
    %v52 = vld [vmem:[%s1 + $0x8] sm:$0xf]
    %v53 = vld [vmem:[%s1 + $0xc] sm:$0xf]
    %v54 = vld [vmem:[%s1 + $0x10] sm:$0xf]
    %v55 = vld [vmem:[%s1 + $0x14] sm:$0xf]
    %v56 = vld [vmem:[%s1 + $0x18] sm:$0xf]
    %v57 = vld [vmem:[%s1 + $0x1c] sm:$0xf]
    %v58 = vld [vmem:[%s1 + $0x20] sm:$0xf]
    %v59 = vld [vmem:[%s1 + $0x24] sm:$0xf]
    %v60 = vld [vmem:[%s1 + $0x28] sm:$0xf]
    %v61 = vld [vmem:[%s1 + $0x2c] sm:$0xf]
    %v62 = vld [vmem:[%s1 + $0x30] sm:$0xf]
    %v63 = vld [vmem:[%s1 + $0x34] sm:$0xf]
    %v64 = vld [vmem:[%s1 + $0x38] sm:$0xf]
    %v65 = vld [vmem:[%s1 + $0x3c] sm:$0xf]
    %v66 = vld [vmem:[%s3] sm:$0x7]
    %v67 = vld [vmem:[#allocation2] sm:$0xf]
    %v68 = vld [vmem:[#allocation2 + $0x4] sm:$0xf]
    %v69 = vld [vmem:[#allocation2 + $0x8] sm:$0xf]
    %v70 = vld [vmem:[#allocation2 + $0xc] sm:$0xf]
    %v71 = vld [vmem:[#allocation2 + $0x10] sm:$0xf]
    %v72 = vld [vmem:[#allocation2 + $0x14] sm:$0xf]
    %v73 = vld [vmem:[#allocation2 + $0x18] sm:$0xf]
    %v74 = vld [vmem:[#allocation2 + $0x1c] sm:$0xf]
    %v75 = vld [vmem:[#allocation2 + $0x20] sm:$0xf]
    %v76 = vld [vmem:[#allocation2 + $0x24] sm:$0xf]
    %v77 = vld [vmem:[#allocation2 + $0x28] sm:$0xf]
    %v78 = vld [vmem:[#allocation2 + $0x2c] sm:$0xf]
    %v79 = vld [vmem:[#allocation2 + $0x30] sm:$0xf]
    %v80 = vld [vmem:[#allocation2 + $0x34] sm:$0xf]
    %v81 = vld [vmem:[#allocation2 + $0x38] sm:$0xf]
    %v82 = vld [vmem:[#allocation2 + $0x3c] sm:$0xf]
    %v99 = vunpack.c.l.b16 %v50
    %v100 = vunpack.c.l.b16 %v51
    %v101 = vunpack.c.l.b16 %v52
    %v102 = vunpack.c.l.b16 %v53
    %v103 = vunpack.c.l.b16 %v54
    %v104 = vunpack.c.l.b16 %v55
    %v105 = vunpack.c.l.b16 %v56
    %v106 = vunpack.c.l.b16 %v57
    %v107 = vunpack.c.l.b16 %v58
    %v108 = vunpack.c.l.b16 %v59
    %v109 = vunpack.c.l.b16 %v60
    %v110 = vunpack.c.l.b16 %v61
    %v111 = vunpack.c.l.b16 %v62
    %v112 = vunpack.c.l.b16 %v63
    %v113 = vunpack.c.l.b16 %v64
    %v114 = vunpack.c.l.b16 %v65
    %v115 = vpack.c.b16 %v100, %v99
    %v116 = vpack.c.b16 %v102, %v101
    %v117 = vpack.c.b16 %v104, %v103
    %v118 = vpack.c.b16 %v106, %v105
    %v119 = vpack.c.b16 %v108, %v107
    %v120 = vpack.c.b16 %v110, %v109
    %v121 = vpack.c.b16 %v112, %v111
    %v122 = vpack.c.b16 %v114, %v113
    %v147 = vunpack.c.l.b16 %v67
    %v148 = vunpack.c.l.b16 %v68
    %v149 = vunpack.c.l.b16 %v69
    %v150 = vunpack.c.l.b16 %v70
    %v151 = vunpack.c.l.b16 %v71
    %v152 = vunpack.c.l.b16 %v72
    %v153 = vunpack.c.l.b16 %v73
    %v154 = vunpack.c.l.b16 %v74
    %v155 = vunpack.c.l.b16 %v75
    %v156 = vunpack.c.l.b16 %v76
    %v157 = vunpack.c.l.b16 %v77
    %v158 = vunpack.c.l.b16 %v78
    %v159 = vunpack.c.l.b16 %v79
    %v160 = vunpack.c.l.b16 %v80
    %v161 = vunpack.c.l.b16 %v81
    %v162 = vunpack.c.l.b16 %v82
    %v163 = vpack.c.b16 %v148, %v147
    %v164 = vpack.c.b16 %v150, %v149
    %v165 = vpack.c.b16 %v152, %v151
    %v166 = vpack.c.b16 %v154, %v153
    %v167 = vpack.c.b16 %v156, %v155
    %v168 = vpack.c.b16 %v158, %v157
    %v169 = vpack.c.b16 %v160, %v159
    %v170 = vpack.c.b16 %v162, %v161
    %179 = vmatpush.bf16.msra.mxu0 %v170
    %180 = vmatpush.bf16.msra.mxu0 %v169
    %181 = vmatpush.bf16.msra.mxu0 %v168
    %182 = vmatpush.bf16.msra.mxu0 %v167
    %183 = vmatpush.bf16.msra.mxu0 %v166
    %184 = vmatpush.bf16.msra.mxu0 %v165
    %185 = vmatpush.bf16.msra.mxu0 %v164
    %186 = vmatpush.bf16.msra.mxu0 %v163
    %187 = vmatmul.bf16.gmra.mxu0 %v115
    %v188 = vpop.f32.mrf.mxu0
    %v189 = vadd.f32 0.0, %v188
    %v190 = vpop.f32.mrf.mxu0
    %v191 = vadd.f32 0.0, %v190
    %192 = vmatmul.bf16.gmra.mxu0 %v116
    %v193 = vpop.f32.mrf.mxu0
    %v194 = vadd.f32 0.0, %v193
    %v195 = vpop.f32.mrf.mxu0
    %v196 = vadd.f32 0.0, %v195
    %197 = vmatmul.bf16.gmra.mxu0 %v117
    %v198 = vpop.f32.mrf.mxu0
    %v199 = vadd.f32 0.0, %v198
    %v200 = vpop.f32.mrf.mxu0
    %v201 = vadd.f32 0.0, %v200
    %202 = vmatmul.bf16.gmra.mxu0 %v118
    %v203 = vpop.f32.mrf.mxu0
    %v204 = vadd.f32 0.0, %v203
    %v205 = vpop.f32.mrf.mxu0
    %v206 = vadd.f32 0.0, %v205
    %207 = vmatmul.bf16.gmra.mxu0 %v119
    %v208 = vpop.f32.mrf.mxu0
    %v209 = vadd.f32 0.0, %v208
    %v210 = vpop.f32.mrf.mxu0
    %v211 = vadd.f32 0.0, %v210
    %212 = vmatmul.bf16.gmra.mxu0 %v120
    %v213 = vpop.f32.mrf.mxu0
    %v214 = vadd.f32 0.0, %v213
    %v215 = vpop.f32.mrf.mxu0
    %v216 = vadd.f32 0.0, %v215
    %217 = vmatmul.bf16.gmra.mxu0 %v121
    %v218 = vpop.f32.mrf.mxu0
    %v219 = vadd.f32 0.0, %v218
    %v220 = vpop.f32.mrf.mxu0
    %v221 = vadd.f32 0.0, %v220
    %222 = vmatmul.bf16.gmra.mxu0 %v122
    %v223 = vpop.f32.mrf.mxu0
    %v224 = vadd.f32 0.0, %v223
    %v225 = vpop.f32.mrf.mxu0
    %v226 = vadd.f32 0.0, %v225
    %227 = vdwg.mxu0
    %v228 = vpack.c.bf16 %v191, %v189
    %v229 = vpack.c.bf16 %v196, %v194
    %v230 = vpack.c.bf16 %v201, %v199
    %v231 = vpack.c.bf16 %v206, %v204
    %v232 = vpack.c.bf16 %v211, %v209
    %v233 = vpack.c.bf16 %v216, %v214
    %v234 = vpack.c.bf16 %v221, %v219
    %v235 = vpack.c.bf16 %v226, %v224
    %v236 = vperm.slane %v66, 0
    %v253 = vunpack.c.l.b16 %v34
    %v254 = vunpack.c.l.b16 %v35
    %v255 = vunpack.c.l.b16 %v36
    %v256 = vunpack.c.l.b16 %v37
    %v257 = vunpack.c.l.b16 %v38
    %v258 = vunpack.c.l.b16 %v39
    %v259 = vunpack.c.l.b16 %v40
    %v260 = vunpack.c.l.b16 %v41
    %v261 = vunpack.c.l.b16 %v42
    %v262 = vunpack.c.l.b16 %v43
    %v263 = vunpack.c.l.b16 %v44
    %v264 = vunpack.c.l.b16 %v45
    %v265 = vunpack.c.l.b16 %v46
    %v266 = vunpack.c.l.b16 %v47
    %v267 = vunpack.c.l.b16 %v48
    %v268 = vunpack.c.l.b16 %v49
    %v269 = vpack.c.b16 %v254, %v253
    %v270 = vpack.c.b16 %v256, %v255
    %v271 = vpack.c.b16 %v258, %v257
    %v272 = vpack.c.b16 %v260, %v259
    %v273 = vpack.c.b16 %v262, %v261
    %v274 = vpack.c.b16 %v264, %v263
    %v275 = vpack.c.b16 %v266, %v265
    %v276 = vpack.c.b16 %v268, %v267
    %285 = vmatpush.bf16.msra.mxu0 %v235
    %286 = vmatpush.bf16.msra.mxu0 %v234
    %287 = vmatpush.bf16.msra.mxu0 %v233
    %288 = vmatpush.bf16.msra.mxu0 %v232
    %289 = vmatpush.bf16.msra.mxu0 %v231
    %290 = vmatpush.bf16.msra.mxu0 %v230
    %291 = vmatpush.bf16.msra.mxu0 %v229
    %292 = vmatpush.bf16.msra.mxu0 %v228
    %293 = vmatmul.bf16.gmra.mxu0 %v269
    %v294 = vpop.f32.mrf.mxu0
    %v295 = vadd.f32 %v236, %v294
    %v296 = vpop.f32.mrf.mxu0
    %v297 = vadd.f32 %v236, %v296
    %298 = vmatmul.bf16.gmra.mxu0 %v270
    %v299 = vpop.f32.mrf.mxu0
    %v300 = vadd.f32 %v236, %v299
    %v301 = vpop.f32.mrf.mxu0
    %v302 = vadd.f32 %v236, %v301
    %303 = vmatmul.bf16.gmra.mxu0 %v271
    %v304 = vpop.f32.mrf.mxu0
    %v305 = vadd.f32 %v236, %v304
    %v306 = vpop.f32.mrf.mxu0
    %v307 = vadd.f32 %v236, %v306
    %308 = vmatmul.bf16.gmra.mxu0 %v272
    %v309 = vpop.f32.mrf.mxu0
    %v310 = vadd.f32 %v236, %v309
    %v311 = vpop.f32.mrf.mxu0
    %v312 = vadd.f32 %v236, %v311
    %313 = vmatmul.bf16.gmra.mxu0 %v273
    %v314 = vpop.f32.mrf.mxu0
    %v315 = vadd.f32 %v236, %v314
    %v316 = vpop.f32.mrf.mxu0
    %v317 = vadd.f32 %v236, %v316
    %318 = vmatmul.bf16.gmra.mxu0 %v274
    %v319 = vpop.f32.mrf.mxu0
    %v320 = vadd.f32 %v236, %v319
    %v321 = vpop.f32.mrf.mxu0
    %v322 = vadd.f32 %v236, %v321
    %323 = vmatmul.bf16.gmra.mxu0 %v275
    %v324 = vpop.f32.mrf.mxu0
    %v325 = vadd.f32 %v236, %v324
    %v326 = vpop.f32.mrf.mxu0
    %v327 = vadd.f32 %v236, %v326
    %328 = vmatmul.bf16.gmra.mxu0 %v276
    %v329 = vpop.f32.mrf.mxu0
    %v330 = vadd.f32 %v236, %v329
    %v331 = vpop.f32.mrf.mxu0
    %v332 = vadd.f32 %v236, %v331
    %333 = vdwg.mxu0
    %vm334 = vcmp.gt.f32.partialorder %v295, 0.0
    %vm335 = vcmp.gt.f32.partialorder %v297, 0.0
    %vm336 = vcmp.gt.f32.partialorder %v300, 0.0
    %vm337 = vcmp.gt.f32.partialorder %v302, 0.0
    %vm338 = vcmp.gt.f32.partialorder %v305, 0.0
    %vm339 = vcmp.gt.f32.partialorder %v307, 0.0
    %vm340 = vcmp.gt.f32.partialorder %v310, 0.0
    %vm341 = vcmp.gt.f32.partialorder %v312, 0.0
    %vm342 = vcmp.gt.f32.partialorder %v315, 0.0
    %vm343 = vcmp.gt.f32.partialorder %v317, 0.0
    %vm344 = vcmp.gt.f32.partialorder %v320, 0.0
    %vm345 = vcmp.gt.f32.partialorder %v322, 0.0
    %vm346 = vcmp.gt.f32.partialorder %v325, 0.0
    %vm347 = vcmp.gt.f32.partialorder %v327, 0.0
    %vm348 = vcmp.gt.f32.partialorder %v330, 0.0
    %vm349 = vcmp.gt.f32.partialorder %v332, 0.0
    %v350 = vmul.f32 %v295, 0.2
    %v351 = vmul.f32 %v297, 0.2
    %v352 = vmul.f32 %v300, 0.2
    %v353 = vmul.f32 %v302, 0.2
    %v354 = vmul.f32 %v305, 0.2
    %v355 = vmul.f32 %v307, 0.2
    %v356 = vmul.f32 %v310, 0.2
    %v357 = vmul.f32 %v312, 0.2
    %v358 = vmul.f32 %v315, 0.2
    %v359 = vmul.f32 %v317, 0.2
    %v360 = vmul.f32 %v320, 0.2
    %v361 = vmul.f32 %v322, 0.2
    %v362 = vmul.f32 %v325, 0.2
    %v363 = vmul.f32 %v327, 0.2
    %v364 = vmul.f32 %v330, 0.2
    %v365 = vmul.f32 %v332, 0.2
    %v366 = vsel %vm334, %v295, %v350
    %v367 = vsel %vm335, %v297, %v351
    %v368 = vsel %vm336, %v300, %v352
    %v369 = vsel %vm337, %v302, %v353
    %v370 = vsel %vm338, %v305, %v354
    %v371 = vsel %vm339, %v307, %v355
    %v372 = vsel %vm340, %v310, %v356
    %v373 = vsel %vm341, %v312, %v357
    %v374 = vsel %vm342, %v315, %v358
    %v375 = vsel %vm343, %v317, %v359
    %v376 = vsel %vm344, %v320, %v360
    %v377 = vsel %vm345, %v322, %v361
    %v378 = vsel %vm346, %v325, %v362
    %v379 = vsel %vm347, %v327, %v363
    %v380 = vsel %vm348, %v330, %v364
    %v381 = vsel %vm349, %v332, %v365
    %v382 = vperm.slane %v66, 1
    %v383 = vmul.f32 %v366, %v382
    %v384 = vmul.f32 %v367, %v382
    %v385 = vmul.f32 %v368, %v382
    %v386 = vmul.f32 %v369, %v382
    %v387 = vmul.f32 %v370, %v382
    %v388 = vmul.f32 %v371, %v382
    %v389 = vmul.f32 %v372, %v382
    %v390 = vmul.f32 %v373, %v382
    %v391 = vmul.f32 %v374, %v382
    %v392 = vmul.f32 %v375, %v382
    %v393 = vmul.f32 %v376, %v382
    %v394 = vmul.f32 %v377, %v382
    %v395 = vmul.f32 %v378, %v382
    %v396 = vmul.f32 %v379, %v382
    %v397 = vmul.f32 %v380, %v382
    %v398 = vmul.f32 %v381, %v382
    %v399 = vperm.slane %v66, 2
    %v400 = vadd.f32 %v383, %v399
    %v401 = vadd.f32 %v384, %v399
    %v402 = vadd.f32 %v385, %v399
    %v403 = vadd.f32 %v386, %v399
    %v404 = vadd.f32 %v387, %v399
    %v405 = vadd.f32 %v388, %v399
    %v406 = vadd.f32 %v389, %v399
    %v407 = vadd.f32 %v390, %v399
    %v408 = vadd.f32 %v391, %v399
    %v409 = vadd.f32 %v392, %v399
    %v410 = vadd.f32 %v393, %v399
    %v411 = vadd.f32 %v394, %v399
    %v412 = vadd.f32 %v395, %v399
    %v413 = vadd.f32 %v396, %v399
    %v414 = vadd.f32 %v397, %v399
    %v415 = vadd.f32 %v398, %v399
    %v416 = vunpack.c.l.bf16 %v50
    %v417 = vunpack.c.l.bf16 %v51
    %v418 = vunpack.c.l.bf16 %v52
    %v419 = vunpack.c.l.bf16 %v53
    %v420 = vunpack.c.l.bf16 %v54
    %v421 = vunpack.c.l.bf16 %v55
    %v422 = vunpack.c.l.bf16 %v56
    %v423 = vunpack.c.l.bf16 %v57
    %v424 = vunpack.c.l.bf16 %v58
    %v425 = vunpack.c.l.bf16 %v59
    %v426 = vunpack.c.l.bf16 %v60
    %v427 = vunpack.c.l.bf16 %v61
    %v428 = vunpack.c.l.bf16 %v62
    %v429 = vunpack.c.l.bf16 %v63
    %v430 = vunpack.c.l.bf16 %v64
    %v431 = vunpack.c.l.bf16 %v65
    %v432 = vadd.f32 %v400, %v416
    %v433 = vadd.f32 %v401, %v417
    %v434 = vadd.f32 %v402, %v418
    %v435 = vadd.f32 %v403, %v419
    %v436 = vadd.f32 %v404, %v420
    %v437 = vadd.f32 %v405, %v421
    %v438 = vadd.f32 %v406, %v422
    %v439 = vadd.f32 %v407, %v423
    %v440 = vadd.f32 %v408, %v424
    %v441 = vadd.f32 %v409, %v425
    %v442 = vadd.f32 %v410, %v426
    %v443 = vadd.f32 %v411, %v427
    %v444 = vadd.f32 %v412, %v428
    %v445 = vadd.f32 %v413, %v429
    %v446 = vadd.f32 %v414, %v430
    %v447 = vadd.f32 %v415, %v431
    %v448 = vpack.c.bf16 %v432, %v432
    %v449 = vpack.c.bf16 %v433, %v433
    %v450 = vpack.c.bf16 %v434, %v434
    %v451 = vpack.c.bf16 %v435, %v435
    %v452 = vpack.c.bf16 %v436, %v436
    %v453 = vpack.c.bf16 %v437, %v437
    %v454 = vpack.c.bf16 %v438, %v438
    %v455 = vpack.c.bf16 %v439, %v439
    %v456 = vpack.c.bf16 %v440, %v440
    %v457 = vpack.c.bf16 %v441, %v441
    %v458 = vpack.c.bf16 %v442, %v442
    %v459 = vpack.c.bf16 %v443, %v443
    %v460 = vpack.c.bf16 %v444, %v444
    %v461 = vpack.c.bf16 %v445, %v445
    %v462 = vpack.c.bf16 %v446, %v446
    %v463 = vpack.c.bf16 %v447, %v447
    %s464 = scalar_lea.vmem %s3, 4
    %v465 = vld [vmem:[%s464] sm:$0x7]
    %s466 = scalar_lea.vmem [#allocation2], 64
    %v467 = vld [vmem:[%s466] sm:$0xf]
    %v468 = vld [vmem:[%s466 + $0x4] sm:$0xf]
    %v469 = vld [vmem:[%s466 + $0x8] sm:$0xf]
    %v470 = vld [vmem:[%s466 + $0xc] sm:$0xf]
    %v471 = vld [vmem:[%s466 + $0x10] sm:$0xf]
    %v472 = vld [vmem:[%s466 + $0x14] sm:$0xf]
    %v473 = vld [vmem:[%s466 + $0x18] sm:$0xf]
    %v474 = vld [vmem:[%s466 + $0x1c] sm:$0xf]
    %v475 = vld [vmem:[%s466 + $0x20] sm:$0xf]
    %v476 = vld [vmem:[%s466 + $0x24] sm:$0xf]
    %v477 = vld [vmem:[%s466 + $0x28] sm:$0xf]
    %v478 = vld [vmem:[%s466 + $0x2c] sm:$0xf]
    %v479 = vld [vmem:[%s466 + $0x30] sm:$0xf]
    %v480 = vld [vmem:[%s466 + $0x34] sm:$0xf]
    %v481 = vld [vmem:[%s466 + $0x38] sm:$0xf]
    %v482 = vld [vmem:[%s466 + $0x3c] sm:$0xf]
    %v499 = vunpack.c.l.b16 %v448
    %v500 = vunpack.c.l.b16 %v449
    %v501 = vunpack.c.l.b16 %v450
    %v502 = vunpack.c.l.b16 %v451
    %v503 = vunpack.c.l.b16 %v452
    %v504 = vunpack.c.l.b16 %v453
    %v505 = vunpack.c.l.b16 %v454
    %v506 = vunpack.c.l.b16 %v455
    %v507 = vunpack.c.l.b16 %v456
    %v508 = vunpack.c.l.b16 %v457
    %v509 = vunpack.c.l.b16 %v458
    %v510 = vunpack.c.l.b16 %v459
    %v511 = vunpack.c.l.b16 %v460
    %v512 = vunpack.c.l.b16 %v461
    %v513 = vunpack.c.l.b16 %v462
    %v514 = vunpack.c.l.b16 %v463
    %v515 = vpack.c.b16 %v500, %v499
    %v516 = vpack.c.b16 %v502, %v501
    %v517 = vpack.c.b16 %v504, %v503
    %v518 = vpack.c.b16 %v506, %v505
    %v519 = vpack.c.b16 %v508, %v507
    %v520 = vpack.c.b16 %v510, %v509
    %v521 = vpack.c.b16 %v512, %v511
    %v522 = vpack.c.b16 %v514, %v513
    %v547 = vunpack.c.l.b16 %v467
    %v548 = vunpack.c.l.b16 %v468
    %v549 = vunpack.c.l.b16 %v469
    %v550 = vunpack.c.l.b16 %v470
    %v551 = vunpack.c.l.b16 %v471
    %v552 = vunpack.c.l.b16 %v472
    %v553 = vunpack.c.l.b16 %v473
    %v554 = vunpack.c.l.b16 %v474
    %v555 = vunpack.c.l.b16 %v475
    %v556 = vunpack.c.l.b16 %v476
    %v557 = vunpack.c.l.b16 %v477
    %v558 = vunpack.c.l.b16 %v478
    %v559 = vunpack.c.l.b16 %v479
    %v560 = vunpack.c.l.b16 %v480
    %v561 = vunpack.c.l.b16 %v481
    %v562 = vunpack.c.l.b16 %v482
    %v563 = vpack.c.b16 %v548, %v547
    %v564 = vpack.c.b16 %v550, %v549
    %v565 = vpack.c.b16 %v552, %v551
    %v566 = vpack.c.b16 %v554, %v553
    %v567 = vpack.c.b16 %v556, %v555
    %v568 = vpack.c.b16 %v558, %v557
    %v569 = vpack.c.b16 %v560, %v559
    %v570 = vpack.c.b16 %v562, %v561
    %579 = vmatpush.bf16.msra.mxu0 %v570
    %580 = vmatpush.bf16.msra.mxu0 %v569
    %581 = vmatpush.bf16.msra.mxu0 %v568
    %582 = vmatpush.bf16.msra.mxu0 %v567
    %583 = vmatpush.bf16.msra.mxu0 %v566
    %584 = vmatpush.bf16.msra.mxu0 %v565
    %585 = vmatpush.bf16.msra.mxu0 %v564
    %586 = vmatpush.bf16.msra.mxu0 %v563
    %587 = vmatmul.bf16.gmra.mxu0 %v515
    %v588 = vpop.f32.mrf.mxu0
    %v589 = vadd.f32 0.0, %v588
    %v590 = vpop.f32.mrf.mxu0
    %v591 = vadd.f32 0.0, %v590
    %592 = vmatmul.bf16.gmra.mxu0 %v516
    %v593 = vpop.f32.mrf.mxu0
    %v594 = vadd.f32 0.0, %v593
    %v595 = vpop.f32.mrf.mxu0
    %v596 = vadd.f32 0.0, %v595
    %597 = vmatmul.bf16.gmra.mxu0 %v517
    %v598 = vpop.f32.mrf.mxu0
    %v599 = vadd.f32 0.0, %v598
    %v600 = vpop.f32.mrf.mxu0
    %v601 = vadd.f32 0.0, %v600
    %602 = vmatmul.bf16.gmra.mxu0 %v518
    %v603 = vpop.f32.mrf.mxu0
    %v604 = vadd.f32 0.0, %v603
    %v605 = vpop.f32.mrf.mxu0
    %v606 = vadd.f32 0.0, %v605
    %607 = vmatmul.bf16.gmra.mxu0 %v519
    %v608 = vpop.f32.mrf.mxu0
    %v609 = vadd.f32 0.0, %v608
    %v610 = vpop.f32.mrf.mxu0
    %v611 = vadd.f32 0.0, %v610
    %612 = vmatmul.bf16.gmra.mxu0 %v520
    %v613 = vpop.f32.mrf.mxu0
    %v614 = vadd.f32 0.0, %v613
    %v615 = vpop.f32.mrf.mxu0
    %v616 = vadd.f32 0.0, %v615
    %617 = vmatmul.bf16.gmra.mxu0 %v521
    %v618 = vpop.f32.mrf.mxu0
    %v619 = vadd.f32 0.0, %v618
    %v620 = vpop.f32.mrf.mxu0
    %v621 = vadd.f32 0.0, %v620
    %622 = vmatmul.bf16.gmra.mxu0 %v522
    %v623 = vpop.f32.mrf.mxu0
    %v624 = vadd.f32 0.0, %v623
    %v625 = vpop.f32.mrf.mxu0
    %v626 = vadd.f32 0.0, %v625
    %627 = vdwg.mxu0
    %v628 = vpack.c.bf16 %v591, %v589
    %v629 = vpack.c.bf16 %v596, %v594
    %v630 = vpack.c.bf16 %v601, %v599
    %v631 = vpack.c.bf16 %v606, %v604
    %v632 = vpack.c.bf16 %v611, %v609
    %v633 = vpack.c.bf16 %v616, %v614
    %v634 = vpack.c.bf16 %v621, %v619
    %v635 = vpack.c.bf16 %v626, %v624
    %v636 = vperm.slane %v465, 0
    %637 = vmatpush.bf16.msra.mxu0 %v635
    %638 = vmatpush.bf16.msra.mxu0 %v634
    %639 = vmatpush.bf16.msra.mxu0 %v633
    %640 = vmatpush.bf16.msra.mxu0 %v632
    %641 = vmatpush.bf16.msra.mxu0 %v631
    %642 = vmatpush.bf16.msra.mxu0 %v630
    %643 = vmatpush.bf16.msra.mxu0 %v629
    %644 = vmatpush.bf16.msra.mxu0 %v628
    %645 = vmatmul.bf16.gmra.mxu0 %v269
    %v646 = vpop.f32.mrf.mxu0
    %v647 = vadd.f32 %v636, %v646
    %v648 = vpop.f32.mrf.mxu0
    %v649 = vadd.f32 %v636, %v648
    %650 = vmatmul.bf16.gmra.mxu0 %v270
    %v651 = vpop.f32.mrf.mxu0
    %v652 = vadd.f32 %v636, %v651
    %v653 = vpop.f32.mrf.mxu0
    %v654 = vadd.f32 %v636, %v653
    %655 = vmatmul.bf16.gmra.mxu0 %v271
    %v656 = vpop.f32.mrf.mxu0
    %v657 = vadd.f32 %v636, %v656
    %v658 = vpop.f32.mrf.mxu0
    %v659 = vadd.f32 %v636, %v658
    %660 = vmatmul.bf16.gmra.mxu0 %v272
    %v661 = vpop.f32.mrf.mxu0
    %v662 = vadd.f32 %v636, %v661
    %v663 = vpop.f32.mrf.mxu0
    %v664 = vadd.f32 %v636, %v663
    %665 = vmatmul.bf16.gmra.mxu0 %v273
    %v666 = vpop.f32.mrf.mxu0
    %v667 = vadd.f32 %v636, %v666
    %v668 = vpop.f32.mrf.mxu0
    %v669 = vadd.f32 %v636, %v668
    %670 = vmatmul.bf16.gmra.mxu0 %v274
    %v671 = vpop.f32.mrf.mxu0
    %v672 = vadd.f32 %v636, %v671
    %v673 = vpop.f32.mrf.mxu0
    %v674 = vadd.f32 %v636, %v673
    %675 = vmatmul.bf16.gmra.mxu0 %v275
    %v676 = vpop.f32.mrf.mxu0
    %v677 = vadd.f32 %v636, %v676
    %v678 = vpop.f32.mrf.mxu0
    %v679 = vadd.f32 %v636, %v678
    %680 = vmatmul.bf16.gmra.mxu0 %v276
    %v681 = vpop.f32.mrf.mxu0
    %v682 = vadd.f32 %v636, %v681
    %v683 = vpop.f32.mrf.mxu0
    %v684 = vadd.f32 %v636, %v683
    %685 = vdwg.mxu0
    %vm686 = vcmp.gt.f32.partialorder %v647, 0.0
    %vm687 = vcmp.gt.f32.partialorder %v649, 0.0
    %vm688 = vcmp.gt.f32.partialorder %v652, 0.0
    %vm689 = vcmp.gt.f32.partialorder %v654, 0.0
    %vm690 = vcmp.gt.f32.partialorder %v657, 0.0
    %vm691 = vcmp.gt.f32.partialorder %v659, 0.0
    %vm692 = vcmp.gt.f32.partialorder %v662, 0.0
    %vm693 = vcmp.gt.f32.partialorder %v664, 0.0
    %vm694 = vcmp.gt.f32.partialorder %v667, 0.0
    %vm695 = vcmp.gt.f32.partialorder %v669, 0.0
    %vm696 = vcmp.gt.f32.partialorder %v672, 0.0
    %vm697 = vcmp.gt.f32.partialorder %v674, 0.0
    %vm698 = vcmp.gt.f32.partialorder %v677, 0.0
    %vm699 = vcmp.gt.f32.partialorder %v679, 0.0
    %vm700 = vcmp.gt.f32.partialorder %v682, 0.0
    %vm701 = vcmp.gt.f32.partialorder %v684, 0.0
    %v702 = vmul.f32 %v647, 0.2
    %v703 = vmul.f32 %v649, 0.2
    %v704 = vmul.f32 %v652, 0.2
    %v705 = vmul.f32 %v654, 0.2
    %v706 = vmul.f32 %v657, 0.2
    %v707 = vmul.f32 %v659, 0.2
    %v708 = vmul.f32 %v662, 0.2
    %v709 = vmul.f32 %v664, 0.2
    %v710 = vmul.f32 %v667, 0.2
    %v711 = vmul.f32 %v669, 0.2
    %v712 = vmul.f32 %v672, 0.2
    %v713 = vmul.f32 %v674, 0.2
    %v714 = vmul.f32 %v677, 0.2
    %v715 = vmul.f32 %v679, 0.2
    %v716 = vmul.f32 %v682, 0.2
    %v717 = vmul.f32 %v684, 0.2
    %v718 = vsel %vm686, %v647, %v702
    %v719 = vsel %vm687, %v649, %v703
    %v720 = vsel %vm688, %v652, %v704
    %v721 = vsel %vm689, %v654, %v705
    %v722 = vsel %vm690, %v657, %v706
    %v723 = vsel %vm691, %v659, %v707
    %v724 = vsel %vm692, %v662, %v708
    %v725 = vsel %vm693, %v664, %v709
    %v726 = vsel %vm694, %v667, %v710
    %v727 = vsel %vm695, %v669, %v711
    %v728 = vsel %vm696, %v672, %v712
    %v729 = vsel %vm697, %v674, %v713
    %v730 = vsel %vm698, %v677, %v714
    %v731 = vsel %vm699, %v679, %v715
    %v732 = vsel %vm700, %v682, %v716
    %v733 = vsel %vm701, %v684, %v717
    %v734 = vperm.slane %v465, 1
    %v735 = vmul.f32 %v718, %v734
    %v736 = vmul.f32 %v719, %v734
    %v737 = vmul.f32 %v720, %v734
    %v738 = vmul.f32 %v721, %v734
    %v739 = vmul.f32 %v722, %v734
    %v740 = vmul.f32 %v723, %v734
    %v741 = vmul.f32 %v724, %v734
    %v742 = vmul.f32 %v725, %v734
    %v743 = vmul.f32 %v726, %v734
    %v744 = vmul.f32 %v727, %v734
    %v745 = vmul.f32 %v728, %v734
    %v746 = vmul.f32 %v729, %v734
    %v747 = vmul.f32 %v730, %v734
    %v748 = vmul.f32 %v731, %v734
    %v749 = vmul.f32 %v732, %v734
    %v750 = vmul.f32 %v733, %v734
    %v751 = vperm.slane %v465, 2
    %v752 = vadd.f32 %v735, %v751
    %v753 = vadd.f32 %v736, %v751
    %v754 = vadd.f32 %v737, %v751
    %v755 = vadd.f32 %v738, %v751
    %v756 = vadd.f32 %v739, %v751
    %v757 = vadd.f32 %v740, %v751
    %v758 = vadd.f32 %v741, %v751
    %v759 = vadd.f32 %v742, %v751
    %v760 = vadd.f32 %v743, %v751
    %v761 = vadd.f32 %v744, %v751
    %v762 = vadd.f32 %v745, %v751
    %v763 = vadd.f32 %v746, %v751
    %v764 = vadd.f32 %v747, %v751
    %v765 = vadd.f32 %v748, %v751
    %v766 = vadd.f32 %v749, %v751
    %v767 = vadd.f32 %v750, %v751
    %v768 = vunpack.c.l.bf16 %v448
    %v769 = vunpack.c.l.bf16 %v449
    %v770 = vunpack.c.l.bf16 %v450
    %v771 = vunpack.c.l.bf16 %v451
    %v772 = vunpack.c.l.bf16 %v452
    %v773 = vunpack.c.l.bf16 %v453
    %v774 = vunpack.c.l.bf16 %v454
    %v775 = vunpack.c.l.bf16 %v455
    %v776 = vunpack.c.l.bf16 %v456
    %v777 = vunpack.c.l.bf16 %v457
    %v778 = vunpack.c.l.bf16 %v458
    %v779 = vunpack.c.l.bf16 %v459
    %v780 = vunpack.c.l.bf16 %v460
    %v781 = vunpack.c.l.bf16 %v461
    %v782 = vunpack.c.l.bf16 %v462
    %v783 = vunpack.c.l.bf16 %v463
    %v784 = vadd.f32 %v752, %v768
    %v785 = vadd.f32 %v753, %v769
    %v786 = vadd.f32 %v754, %v770
    %v787 = vadd.f32 %v755, %v771
    %v788 = vadd.f32 %v756, %v772
    %v789 = vadd.f32 %v757, %v773
    %v790 = vadd.f32 %v758, %v774
    %v791 = vadd.f32 %v759, %v775
    %v792 = vadd.f32 %v760, %v776
    %v793 = vadd.f32 %v761, %v777
    %v794 = vadd.f32 %v762, %v778
    %v795 = vadd.f32 %v763, %v779
    %v796 = vadd.f32 %v764, %v780
    %v797 = vadd.f32 %v765, %v781
    %v798 = vadd.f32 %v766, %v782
    %v799 = vadd.f32 %v767, %v783
    %v800 = vpack.c.bf16 %v784, %v784
    %v801 = vpack.c.bf16 %v785, %v785
    %v802 = vpack.c.bf16 %v786, %v786
    %v803 = vpack.c.bf16 %v787, %v787
    %v804 = vpack.c.bf16 %v788, %v788
    %v805 = vpack.c.bf16 %v789, %v789
    %v806 = vpack.c.bf16 %v790, %v790
    %v807 = vpack.c.bf16 %v791, %v791
    %v808 = vpack.c.bf16 %v792, %v792
    %v809 = vpack.c.bf16 %v793, %v793
    %v810 = vpack.c.bf16 %v794, %v794
    %v811 = vpack.c.bf16 %v795, %v795
    %v812 = vpack.c.bf16 %v796, %v796
    %v813 = vpack.c.bf16 %v797, %v797
    %v814 = vpack.c.bf16 %v798, %v798
    %v815 = vpack.c.bf16 %v799, %v799
    %s816 = scalar_lea.vmem %s3, 8
    %v817 = vld [vmem:[%s816] sm:$0x7]
    %s818 = scalar_lea.vmem [#allocation2], 128
    %v819 = vld [vmem:[%s818] sm:$0xf]
    %v820 = vld [vmem:[%s818 + $0x4] sm:$0xf]
    %v821 = vld [vmem:[%s818 + $0x8] sm:$0xf]
    %v822 = vld [vmem:[%s818 + $0xc] sm:$0xf]
    %v823 = vld [vmem:[%s818 + $0x10] sm:$0xf]
    %v824 = vld [vmem:[%s818 + $0x14] sm:$0xf]
    %v825 = vld [vmem:[%s818 + $0x18] sm:$0xf]
    %v826 = vld [vmem:[%s818 + $0x1c] sm:$0xf]
    %v827 = vld [vmem:[%s818 + $0x20] sm:$0xf]
    %v828 = vld [vmem:[%s818 + $0x24] sm:$0xf]
    %v829 = vld [vmem:[%s818 + $0x28] sm:$0xf]
    %v830 = vld [vmem:[%s818 + $0x2c] sm:$0xf]
    %v831 = vld [vmem:[%s818 + $0x30] sm:$0xf]
    %v832 = vld [vmem:[%s818 + $0x34] sm:$0xf]
    %v833 = vld [vmem:[%s818 + $0x38] sm:$0xf]
    %v834 = vld [vmem:[%s818 + $0x3c] sm:$0xf]
    %v851 = vunpack.c.l.b16 %v800
    %v852 = vunpack.c.l.b16 %v801
    %v853 = vunpack.c.l.b16 %v802
    %v854 = vunpack.c.l.b16 %v803
    %v855 = vunpack.c.l.b16 %v804
    %v856 = vunpack.c.l.b16 %v805
    %v857 = vunpack.c.l.b16 %v806
    %v858 = vunpack.c.l.b16 %v807
    %v859 = vunpack.c.l.b16 %v808
    %v860 = vunpack.c.l.b16 %v809
    %v861 = vunpack.c.l.b16 %v810
    %v862 = vunpack.c.l.b16 %v811
    %v863 = vunpack.c.l.b16 %v812
    %v864 = vunpack.c.l.b16 %v813
    %v865 = vunpack.c.l.b16 %v814
    %v866 = vunpack.c.l.b16 %v815
    %v867 = vpack.c.b16 %v852, %v851
    %v868 = vpack.c.b16 %v854, %v853
    %v869 = vpack.c.b16 %v856, %v855
    %v870 = vpack.c.b16 %v858, %v857
    %v871 = vpack.c.b16 %v860, %v859
    %v872 = vpack.c.b16 %v862, %v861
    %v873 = vpack.c.b16 %v864, %v863
    %v874 = vpack.c.b16 %v866, %v865
    %v899 = vunpack.c.l.b16 %v819
    %v900 = vunpack.c.l.b16 %v820
    %v901 = vunpack.c.l.b16 %v821
    %v902 = vunpack.c.l.b16 %v822
    %v903 = vunpack.c.l.b16 %v823
    %v904 = vunpack.c.l.b16 %v824
    %v905 = vunpack.c.l.b16 %v825
    %v906 = vunpack.c.l.b16 %v826
    %v907 = vunpack.c.l.b16 %v827
    %v908 = vunpack.c.l.b16 %v828
    %v909 = vunpack.c.l.b16 %v829
    %v910 = vunpack.c.l.b16 %v830
    %v911 = vunpack.c.l.b16 %v831
    %v912 = vunpack.c.l.b16 %v832
    %v913 = vunpack.c.l.b16 %v833
    %v914 = vunpack.c.l.b16 %v834
    %v915 = vpack.c.b16 %v900, %v899
    %v916 = vpack.c.b16 %v902, %v901
    %v917 = vpack.c.b16 %v904, %v903
    %v918 = vpack.c.b16 %v906, %v905
    %v919 = vpack.c.b16 %v908, %v907
    %v920 = vpack.c.b16 %v910, %v909
    %v921 = vpack.c.b16 %v912, %v911
    %v922 = vpack.c.b16 %v914, %v913
    %931 = vmatpush.bf16.msra.mxu0 %v922
    %932 = vmatpush.bf16.msra.mxu0 %v921
    %933 = vmatpush.bf16.msra.mxu0 %v920
    %934 = vmatpush.bf16.msra.mxu0 %v919
    %935 = vmatpush.bf16.msra.mxu0 %v918
    %936 = vmatpush.bf16.msra.mxu0 %v917
    %937 = vmatpush.bf16.msra.mxu0 %v916
    %938 = vmatpush.bf16.msra.mxu0 %v915
    %939 = vmatmul.bf16.gmra.mxu0 %v867
    %v940 = vpop.f32.mrf.mxu0
    %v941 = vadd.f32 0.0, %v940
    %v942 = vpop.f32.mrf.mxu0
    %v943 = vadd.f32 0.0, %v942
    %944 = vmatmul.bf16.gmra.mxu0 %v868
    %v945 = vpop.f32.mrf.mxu0
    %v946 = vadd.f32 0.0, %v945
    %v947 = vpop.f32.mrf.mxu0
    %v948 = vadd.f32 0.0, %v947
    %949 = vmatmul.bf16.gmra.mxu0 %v869
    %v950 = vpop.f32.mrf.mxu0
    %v951 = vadd.f32 0.0, %v950
    %v952 = vpop.f32.mrf.mxu0
    %v953 = vadd.f32 0.0, %v952
    %954 = vmatmul.bf16.gmra.mxu0 %v870
    %v955 = vpop.f32.mrf.mxu0
    %v956 = vadd.f32 0.0, %v955
    %v957 = vpop.f32.mrf.mxu0
    %v958 = vadd.f32 0.0, %v957
    %959 = vmatmul.bf16.gmra.mxu0 %v871
    %v960 = vpop.f32.mrf.mxu0
    %v961 = vadd.f32 0.0, %v960
    %v962 = vpop.f32.mrf.mxu0
    %v963 = vadd.f32 0.0, %v962
    %964 = vmatmul.bf16.gmra.mxu0 %v872
    %v965 = vpop.f32.mrf.mxu0
    %v966 = vadd.f32 0.0, %v965
    %v967 = vpop.f32.mrf.mxu0
    %v968 = vadd.f32 0.0, %v967
    %969 = vmatmul.bf16.gmra.mxu0 %v873
    %v970 = vpop.f32.mrf.mxu0
    %v971 = vadd.f32 0.0, %v970
    %v972 = vpop.f32.mrf.mxu0
    %v973 = vadd.f32 0.0, %v972
    %974 = vmatmul.bf16.gmra.mxu0 %v874
    %v975 = vpop.f32.mrf.mxu0
    %v976 = vadd.f32 0.0, %v975
    %v977 = vpop.f32.mrf.mxu0
    %v978 = vadd.f32 0.0, %v977
    %979 = vdwg.mxu0
    %v980 = vpack.c.bf16 %v943, %v941
    %v981 = vpack.c.bf16 %v948, %v946
    %v982 = vpack.c.bf16 %v953, %v951
    %v983 = vpack.c.bf16 %v958, %v956
    %v984 = vpack.c.bf16 %v963, %v961
    %v985 = vpack.c.bf16 %v968, %v966
    %v986 = vpack.c.bf16 %v973, %v971
    %v987 = vpack.c.bf16 %v978, %v976
    %v988 = vperm.slane %v817, 0
    %989 = vmatpush.bf16.msra.mxu0 %v987
    %990 = vmatpush.bf16.msra.mxu0 %v986
    %991 = vmatpush.bf16.msra.mxu0 %v985
    %992 = vmatpush.bf16.msra.mxu0 %v984
    %993 = vmatpush.bf16.msra.mxu0 %v983
    %994 = vmatpush.bf16.msra.mxu0 %v982
    %995 = vmatpush.bf16.msra.mxu0 %v981
    %996 = vmatpush.bf16.msra.mxu0 %v980
    %997 = vmatmul.bf16.gmra.mxu0 %v269
    %v998 = vpop.f32.mrf.mxu0
    %v999 = vadd.f32 %v988, %v998
    %v1000 = vpop.f32.mrf.mxu0
    %v1001 = vadd.f32 %v988, %v1000
    %1002 = vmatmul.bf16.gmra.mxu0 %v270
    %v1003 = vpop.f32.mrf.mxu0
    %v1004 = vadd.f32 %v988, %v1003
    %v1005 = vpop.f32.mrf.mxu0
    %v1006 = vadd.f32 %v988, %v1005
    %1007 = vmatmul.bf16.gmra.mxu0 %v271
    %v1008 = vpop.f32.mrf.mxu0
    %v1009 = vadd.f32 %v988, %v1008
    %v1010 = vpop.f32.mrf.mxu0
    %v1011 = vadd.f32 %v988, %v1010
    %1012 = vmatmul.bf16.gmra.mxu0 %v272
    %v1013 = vpop.f32.mrf.mxu0
    %v1014 = vadd.f32 %v988, %v1013
    %v1015 = vpop.f32.mrf.mxu0
    %v1016 = vadd.f32 %v988, %v1015
    %1017 = vmatmul.bf16.gmra.mxu0 %v273
    %v1018 = vpop.f32.mrf.mxu0
    %v1019 = vadd.f32 %v988, %v1018
    %v1020 = vpop.f32.mrf.mxu0
    %v1021 = vadd.f32 %v988, %v1020
    %1022 = vmatmul.bf16.gmra.mxu0 %v274
    %v1023 = vpop.f32.mrf.mxu0
    %v1024 = vadd.f32 %v988, %v1023
    %v1025 = vpop.f32.mrf.mxu0
    %v1026 = vadd.f32 %v988, %v1025
    %1027 = vmatmul.bf16.gmra.mxu0 %v275
    %v1028 = vpop.f32.mrf.mxu0
    %v1029 = vadd.f32 %v988, %v1028
    %v1030 = vpop.f32.mrf.mxu0
    %v1031 = vadd.f32 %v988, %v1030
    %1032 = vmatmul.bf16.gmra.mxu0 %v276
    %v1033 = vpop.f32.mrf.mxu0
    %v1034 = vadd.f32 %v988, %v1033
    %v1035 = vpop.f32.mrf.mxu0
    %v1036 = vadd.f32 %v988, %v1035
    %1037 = vdwg.mxu0
    %vm1038 = vcmp.gt.f32.partialorder %v999, 0.0
    %vm1039 = vcmp.gt.f32.partialorder %v1001, 0.0
    %vm1040 = vcmp.gt.f32.partialorder %v1004, 0.0
    %vm1041 = vcmp.gt.f32.partialorder %v1006, 0.0
    %vm1042 = vcmp.gt.f32.partialorder %v1009, 0.0
    %vm1043 = vcmp.gt.f32.partialorder %v1011, 0.0
    %vm1044 = vcmp.gt.f32.partialorder %v1014, 0.0
    %vm1045 = vcmp.gt.f32.partialorder %v1016, 0.0
    %vm1046 = vcmp.gt.f32.partialorder %v1019, 0.0
    %vm1047 = vcmp.gt.f32.partialorder %v1021, 0.0
    %vm1048 = vcmp.gt.f32.partialorder %v1024, 0.0
    %vm1049 = vcmp.gt.f32.partialorder %v1026, 0.0
    %vm1050 = vcmp.gt.f32.partialorder %v1029, 0.0
    %vm1051 = vcmp.gt.f32.partialorder %v1031, 0.0
    %vm1052 = vcmp.gt.f32.partialorder %v1034, 0.0
    %vm1053 = vcmp.gt.f32.partialorder %v1036, 0.0
    %v1054 = vmul.f32 %v999, 0.2
    %v1055 = vmul.f32 %v1001, 0.2
    %v1056 = vmul.f32 %v1004, 0.2
    %v1057 = vmul.f32 %v1006, 0.2
    %v1058 = vmul.f32 %v1009, 0.2
    %v1059 = vmul.f32 %v1011, 0.2
    %v1060 = vmul.f32 %v1014, 0.2
    %v1061 = vmul.f32 %v1016, 0.2
    %v1062 = vmul.f32 %v1019, 0.2
    %v1063 = vmul.f32 %v1021, 0.2
    %v1064 = vmul.f32 %v1024, 0.2
    %v1065 = vmul.f32 %v1026, 0.2
    %v1066 = vmul.f32 %v1029, 0.2
    %v1067 = vmul.f32 %v1031, 0.2
    %v1068 = vmul.f32 %v1034, 0.2
    %v1069 = vmul.f32 %v1036, 0.2
    %v1070 = vsel %vm1038, %v999, %v1054
    %v1071 = vsel %vm1039, %v1001, %v1055
    %v1072 = vsel %vm1040, %v1004, %v1056
    %v1073 = vsel %vm1041, %v1006, %v1057
    %v1074 = vsel %vm1042, %v1009, %v1058
    %v1075 = vsel %vm1043, %v1011, %v1059
    %v1076 = vsel %vm1044, %v1014, %v1060
    %v1077 = vsel %vm1045, %v1016, %v1061
    %v1078 = vsel %vm1046, %v1019, %v1062
    %v1079 = vsel %vm1047, %v1021, %v1063
    %v1080 = vsel %vm1048, %v1024, %v1064
    %v1081 = vsel %vm1049, %v1026, %v1065
    %v1082 = vsel %vm1050, %v1029, %v1066
    %v1083 = vsel %vm1051, %v1031, %v1067
    %v1084 = vsel %vm1052, %v1034, %v1068
    %v1085 = vsel %vm1053, %v1036, %v1069
    %v1086 = vperm.slane %v817, 1
    %v1087 = vmul.f32 %v1070, %v1086
    %v1088 = vmul.f32 %v1071, %v1086
    %v1089 = vmul.f32 %v1072, %v1086
    %v1090 = vmul.f32 %v1073, %v1086
    %v1091 = vmul.f32 %v1074, %v1086
    %v1092 = vmul.f32 %v1075, %v1086
    %v1093 = vmul.f32 %v1076, %v1086
    %v1094 = vmul.f32 %v1077, %v1086
    %v1095 = vmul.f32 %v1078, %v1086
    %v1096 = vmul.f32 %v1079, %v1086
    %v1097 = vmul.f32 %v1080, %v1086
    %v1098 = vmul.f32 %v1081, %v1086
    %v1099 = vmul.f32 %v1082, %v1086
    %v1100 = vmul.f32 %v1083, %v1086
    %v1101 = vmul.f32 %v1084, %v1086
    %v1102 = vmul.f32 %v1085, %v1086
    %v1103 = vperm.slane %v817, 2
    %v1104 = vadd.f32 %v1087, %v1103
    %v1105 = vadd.f32 %v1088, %v1103
    %v1106 = vadd.f32 %v1089, %v1103
    %v1107 = vadd.f32 %v1090, %v1103
    %v1108 = vadd.f32 %v1091, %v1103
    %v1109 = vadd.f32 %v1092, %v1103
    %v1110 = vadd.f32 %v1093, %v1103
    %v1111 = vadd.f32 %v1094, %v1103
    %v1112 = vadd.f32 %v1095, %v1103
    %v1113 = vadd.f32 %v1096, %v1103
    %v1114 = vadd.f32 %v1097, %v1103
    %v1115 = vadd.f32 %v1098, %v1103
    %v1116 = vadd.f32 %v1099, %v1103
    %v1117 = vadd.f32 %v1100, %v1103
    %v1118 = vadd.f32 %v1101, %v1103
    %v1119 = vadd.f32 %v1102, %v1103
    %v1120 = vunpack.c.l.bf16 %v800
    %v1121 = vunpack.c.l.bf16 %v801
    %v1122 = vunpack.c.l.bf16 %v802
    %v1123 = vunpack.c.l.bf16 %v803
    %v1124 = vunpack.c.l.bf16 %v804
    %v1125 = vunpack.c.l.bf16 %v805
    %v1126 = vunpack.c.l.bf16 %v806
    %v1127 = vunpack.c.l.bf16 %v807
    %v1128 = vunpack.c.l.bf16 %v808
    %v1129 = vunpack.c.l.bf16 %v809
    %v1130 = vunpack.c.l.bf16 %v810
    %v1131 = vunpack.c.l.bf16 %v811
    %v1132 = vunpack.c.l.bf16 %v812
    %v1133 = vunpack.c.l.bf16 %v813
    %v1134 = vunpack.c.l.bf16 %v814
    %v1135 = vunpack.c.l.bf16 %v815
    %v1136 = vadd.f32 %v1104, %v1120
    %v1137 = vadd.f32 %v1105, %v1121
    %v1138 = vadd.f32 %v1106, %v1122
    %v1139 = vadd.f32 %v1107, %v1123
    %v1140 = vadd.f32 %v1108, %v1124
    %v1141 = vadd.f32 %v1109, %v1125
    %v1142 = vadd.f32 %v1110, %v1126
    %v1143 = vadd.f32 %v1111, %v1127
    %v1144 = vadd.f32 %v1112, %v1128
    %v1145 = vadd.f32 %v1113, %v1129
    %v1146 = vadd.f32 %v1114, %v1130
    %v1147 = vadd.f32 %v1115, %v1131
    %v1148 = vadd.f32 %v1116, %v1132
    %v1149 = vadd.f32 %v1117, %v1133
    %v1150 = vadd.f32 %v1118, %v1134
    %v1151 = vadd.f32 %v1119, %v1135
    %v1152 = vpack.c.bf16 %v1136, %v1136
    %v1153 = vpack.c.bf16 %v1137, %v1137
    %v1154 = vpack.c.bf16 %v1138, %v1138
    %v1155 = vpack.c.bf16 %v1139, %v1139
    %v1156 = vpack.c.bf16 %v1140, %v1140
    %v1157 = vpack.c.bf16 %v1141, %v1141
    %v1158 = vpack.c.bf16 %v1142, %v1142
    %v1159 = vpack.c.bf16 %v1143, %v1143
    %v1160 = vpack.c.bf16 %v1144, %v1144
    %v1161 = vpack.c.bf16 %v1145, %v1145
    %v1162 = vpack.c.bf16 %v1146, %v1146
    %v1163 = vpack.c.bf16 %v1147, %v1147
    %v1164 = vpack.c.bf16 %v1148, %v1148
    %v1165 = vpack.c.bf16 %v1149, %v1149
    %v1166 = vpack.c.bf16 %v1150, %v1150
    %v1167 = vpack.c.bf16 %v1151, %v1151
    %s1168 = scalar_lea.vmem %s3, 12
    %v1169 = vld [vmem:[%s1168] sm:$0x7]
    %s1170 = scalar_lea.vmem [#allocation2], 192
    %v1171 = vld [vmem:[%s1170] sm:$0xf]
    %v1172 = vld [vmem:[%s1170 + $0x4] sm:$0xf]
    %v1173 = vld [vmem:[%s1170 + $0x8] sm:$0xf]
    %v1174 = vld [vmem:[%s1170 + $0xc] sm:$0xf]
    %v1175 = vld [vmem:[%s1170 + $0x10] sm:$0xf]
    %v1176 = vld [vmem:[%s1170 + $0x14] sm:$0xf]
    %v1177 = vld [vmem:[%s1170 + $0x18] sm:$0xf]
    %v1178 = vld [vmem:[%s1170 + $0x1c] sm:$0xf]
    %v1179 = vld [vmem:[%s1170 + $0x20] sm:$0xf]
    %v1180 = vld [vmem:[%s1170 + $0x24] sm:$0xf]
    %v1181 = vld [vmem:[%s1170 + $0x28] sm:$0xf]
    %v1182 = vld [vmem:[%s1170 + $0x2c] sm:$0xf]
    %v1183 = vld [vmem:[%s1170 + $0x30] sm:$0xf]
    %v1184 = vld [vmem:[%s1170 + $0x34] sm:$0xf]
    %v1185 = vld [vmem:[%s1170 + $0x38] sm:$0xf]
    %v1186 = vld [vmem:[%s1170 + $0x3c] sm:$0xf]
    %v1203 = vunpack.c.l.b16 %v1152
    %v1204 = vunpack.c.l.b16 %v1153
    %v1205 = vunpack.c.l.b16 %v1154
    %v1206 = vunpack.c.l.b16 %v1155
    %v1207 = vunpack.c.l.b16 %v1156
    %v1208 = vunpack.c.l.b16 %v1157
    %v1209 = vunpack.c.l.b16 %v1158
    %v1210 = vunpack.c.l.b16 %v1159
    %v1211 = vunpack.c.l.b16 %v1160
    %v1212 = vunpack.c.l.b16 %v1161
    %v1213 = vunpack.c.l.b16 %v1162
    %v1214 = vunpack.c.l.b16 %v1163
    %v1215 = vunpack.c.l.b16 %v1164
    %v1216 = vunpack.c.l.b16 %v1165
    %v1217 = vunpack.c.l.b16 %v1166
    %v1218 = vunpack.c.l.b16 %v1167
    %v1219 = vpack.c.b16 %v1204, %v1203
    %v1220 = vpack.c.b16 %v1206, %v1205
    %v1221 = vpack.c.b16 %v1208, %v1207
    %v1222 = vpack.c.b16 %v1210, %v1209
    %v1223 = vpack.c.b16 %v1212, %v1211
    %v1224 = vpack.c.b16 %v1214, %v1213
    %v1225 = vpack.c.b16 %v1216, %v1215
    %v1226 = vpack.c.b16 %v1218, %v1217
    %v1251 = vunpack.c.l.b16 %v1171
    %v1252 = vunpack.c.l.b16 %v1172
    %v1253 = vunpack.c.l.b16 %v1173
    %v1254 = vunpack.c.l.b16 %v1174
    %v1255 = vunpack.c.l.b16 %v1175
    %v1256 = vunpack.c.l.b16 %v1176
    %v1257 = vunpack.c.l.b16 %v1177
    %v1258 = vunpack.c.l.b16 %v1178
    %v1259 = vunpack.c.l.b16 %v1179
    %v1260 = vunpack.c.l.b16 %v1180
    %v1261 = vunpack.c.l.b16 %v1181
    %v1262 = vunpack.c.l.b16 %v1182
    %v1263 = vunpack.c.l.b16 %v1183
    %v1264 = vunpack.c.l.b16 %v1184
    %v1265 = vunpack.c.l.b16 %v1185
    %v1266 = vunpack.c.l.b16 %v1186
    %v1267 = vpack.c.b16 %v1252, %v1251
    %v1268 = vpack.c.b16 %v1254, %v1253
    %v1269 = vpack.c.b16 %v1256, %v1255
    %v1270 = vpack.c.b16 %v1258, %v1257
    %v1271 = vpack.c.b16 %v1260, %v1259
    %v1272 = vpack.c.b16 %v1262, %v1261
    %v1273 = vpack.c.b16 %v1264, %v1263
    %v1274 = vpack.c.b16 %v1266, %v1265
    %1283 = vmatpush.bf16.msra.mxu0 %v1274
    %1284 = vmatpush.bf16.msra.mxu0 %v1273
    %1285 = vmatpush.bf16.msra.mxu0 %v1272
    %1286 = vmatpush.bf16.msra.mxu0 %v1271
    %1287 = vmatpush.bf16.msra.mxu0 %v1270
    %1288 = vmatpush.bf16.msra.mxu0 %v1269
    %1289 = vmatpush.bf16.msra.mxu0 %v1268
    %1290 = vmatpush.bf16.msra.mxu0 %v1267
    %1291 = vmatmul.bf16.gmra.mxu0 %v1219
    %v1292 = vpop.f32.mrf.mxu0
    %v1293 = vadd.f32 0.0, %v1292
    %v1294 = vpop.f32.mrf.mxu0
    %v1295 = vadd.f32 0.0, %v1294
    %1296 = vmatmul.bf16.gmra.mxu0 %v1220
    %v1297 = vpop.f32.mrf.mxu0
    %v1298 = vadd.f32 0.0, %v1297
    %v1299 = vpop.f32.mrf.mxu0
    %v1300 = vadd.f32 0.0, %v1299
    %1301 = vmatmul.bf16.gmra.mxu0 %v1221
    %v1302 = vpop.f32.mrf.mxu0
    %v1303 = vadd.f32 0.0, %v1302
    %v1304 = vpop.f32.mrf.mxu0
    %v1305 = vadd.f32 0.0, %v1304
    %1306 = vmatmul.bf16.gmra.mxu0 %v1222
    %v1307 = vpop.f32.mrf.mxu0
    %v1308 = vadd.f32 0.0, %v1307
    %v1309 = vpop.f32.mrf.mxu0
    %v1310 = vadd.f32 0.0, %v1309
    %1311 = vmatmul.bf16.gmra.mxu0 %v1223
    %v1312 = vpop.f32.mrf.mxu0
    %v1313 = vadd.f32 0.0, %v1312
    %v1314 = vpop.f32.mrf.mxu0
    %v1315 = vadd.f32 0.0, %v1314
    %1316 = vmatmul.bf16.gmra.mxu0 %v1224
    %v1317 = vpop.f32.mrf.mxu0
    %v1318 = vadd.f32 0.0, %v1317
    %v1319 = vpop.f32.mrf.mxu0
    %v1320 = vadd.f32 0.0, %v1319
    %1321 = vmatmul.bf16.gmra.mxu0 %v1225
    %v1322 = vpop.f32.mrf.mxu0
    %v1323 = vadd.f32 0.0, %v1322
    %v1324 = vpop.f32.mrf.mxu0
    %v1325 = vadd.f32 0.0, %v1324
    %1326 = vmatmul.bf16.gmra.mxu0 %v1226
    %v1327 = vpop.f32.mrf.mxu0
    %v1328 = vadd.f32 0.0, %v1327
    %v1329 = vpop.f32.mrf.mxu0
    %v1330 = vadd.f32 0.0, %v1329
    %1331 = vdwg.mxu0
    %v1332 = vpack.c.bf16 %v1295, %v1293
    %v1333 = vpack.c.bf16 %v1300, %v1298
    %v1334 = vpack.c.bf16 %v1305, %v1303
    %v1335 = vpack.c.bf16 %v1310, %v1308
    %v1336 = vpack.c.bf16 %v1315, %v1313
    %v1337 = vpack.c.bf16 %v1320, %v1318
    %v1338 = vpack.c.bf16 %v1325, %v1323
    %v1339 = vpack.c.bf16 %v1330, %v1328
    %v1340 = vperm.slane %v1169, 0
    %1341 = vmatpush.bf16.msra.mxu0 %v1339
    %1342 = vmatpush.bf16.msra.mxu0 %v1338
    %1343 = vmatpush.bf16.msra.mxu0 %v1337
    %1344 = vmatpush.bf16.msra.mxu0 %v1336
    %1345 = vmatpush.bf16.msra.mxu0 %v1335
    %1346 = vmatpush.bf16.msra.mxu0 %v1334
    %1347 = vmatpush.bf16.msra.mxu0 %v1333
    %1348 = vmatpush.bf16.msra.mxu0 %v1332
    %1349 = vmatmul.bf16.gmra.mxu0 %v269
    %v1350 = vpop.f32.mrf.mxu0
    %v1351 = vadd.f32 %v1340, %v1350
    %v1352 = vpop.f32.mrf.mxu0
    %v1353 = vadd.f32 %v1340, %v1352
    %1354 = vmatmul.bf16.gmra.mxu0 %v270
    %v1355 = vpop.f32.mrf.mxu0
    %v1356 = vadd.f32 %v1340, %v1355
    %v1357 = vpop.f32.mrf.mxu0
    %v1358 = vadd.f32 %v1340, %v1357
    %1359 = vmatmul.bf16.gmra.mxu0 %v271
    %v1360 = vpop.f32.mrf.mxu0
    %v1361 = vadd.f32 %v1340, %v1360
    %v1362 = vpop.f32.mrf.mxu0
    %v1363 = vadd.f32 %v1340, %v1362
    %1364 = vmatmul.bf16.gmra.mxu0 %v272
    %v1365 = vpop.f32.mrf.mxu0
    %v1366 = vadd.f32 %v1340, %v1365
    %v1367 = vpop.f32.mrf.mxu0
    %v1368 = vadd.f32 %v1340, %v1367
    %1369 = vmatmul.bf16.gmra.mxu0 %v273
    %v1370 = vpop.f32.mrf.mxu0
    %v1371 = vadd.f32 %v1340, %v1370
    %v1372 = vpop.f32.mrf.mxu0
    %v1373 = vadd.f32 %v1340, %v1372
    %1374 = vmatmul.bf16.gmra.mxu0 %v274
    %v1375 = vpop.f32.mrf.mxu0
    %v1376 = vadd.f32 %v1340, %v1375
    %v1377 = vpop.f32.mrf.mxu0
    %v1378 = vadd.f32 %v1340, %v1377
    %1379 = vmatmul.bf16.gmra.mxu0 %v275
    %v1380 = vpop.f32.mrf.mxu0
    %v1381 = vadd.f32 %v1340, %v1380
    %v1382 = vpop.f32.mrf.mxu0
    %v1383 = vadd.f32 %v1340, %v1382
    %1384 = vmatmul.bf16.gmra.mxu0 %v276
    %v1385 = vpop.f32.mrf.mxu0
    %v1386 = vadd.f32 %v1340, %v1385
    %v1387 = vpop.f32.mrf.mxu0
    %v1388 = vadd.f32 %v1340, %v1387
    %1389 = vdwg.mxu0
    %vm1390 = vcmp.gt.f32.partialorder %v1351, 0.0
    %vm1391 = vcmp.gt.f32.partialorder %v1353, 0.0
    %vm1392 = vcmp.gt.f32.partialorder %v1356, 0.0
    %vm1393 = vcmp.gt.f32.partialorder %v1358, 0.0
    %vm1394 = vcmp.gt.f32.partialorder %v1361, 0.0
    %vm1395 = vcmp.gt.f32.partialorder %v1363, 0.0
    %vm1396 = vcmp.gt.f32.partialorder %v1366, 0.0
    %vm1397 = vcmp.gt.f32.partialorder %v1368, 0.0
    %vm1398 = vcmp.gt.f32.partialorder %v1371, 0.0
    %vm1399 = vcmp.gt.f32.partialorder %v1373, 0.0
    %vm1400 = vcmp.gt.f32.partialorder %v1376, 0.0
    %vm1401 = vcmp.gt.f32.partialorder %v1378, 0.0
    %vm1402 = vcmp.gt.f32.partialorder %v1381, 0.0
    %vm1403 = vcmp.gt.f32.partialorder %v1383, 0.0
    %vm1404 = vcmp.gt.f32.partialorder %v1386, 0.0
    %vm1405 = vcmp.gt.f32.partialorder %v1388, 0.0
    %v1406 = vmul.f32 %v1351, 0.2
    %v1407 = vmul.f32 %v1353, 0.2
    %v1408 = vmul.f32 %v1356, 0.2
    %v1409 = vmul.f32 %v1358, 0.2
    %v1410 = vmul.f32 %v1361, 0.2
    %v1411 = vmul.f32 %v1363, 0.2
    %v1412 = vmul.f32 %v1366, 0.2
    %v1413 = vmul.f32 %v1368, 0.2
    %v1414 = vmul.f32 %v1371, 0.2
    %v1415 = vmul.f32 %v1373, 0.2
    %v1416 = vmul.f32 %v1376, 0.2
    %v1417 = vmul.f32 %v1378, 0.2
    %v1418 = vmul.f32 %v1381, 0.2
    %v1419 = vmul.f32 %v1383, 0.2
    %v1420 = vmul.f32 %v1386, 0.2
    %v1421 = vmul.f32 %v1388, 0.2
    %v1422 = vsel %vm1390, %v1351, %v1406
    %v1423 = vsel %vm1391, %v1353, %v1407
    %v1424 = vsel %vm1392, %v1356, %v1408
    %v1425 = vsel %vm1393, %v1358, %v1409
    %v1426 = vsel %vm1394, %v1361, %v1410
    %v1427 = vsel %vm1395, %v1363, %v1411
    %v1428 = vsel %vm1396, %v1366, %v1412
    %v1429 = vsel %vm1397, %v1368, %v1413
    %v1430 = vsel %vm1398, %v1371, %v1414
    %v1431 = vsel %vm1399, %v1373, %v1415
    %v1432 = vsel %vm1400, %v1376, %v1416
    %v1433 = vsel %vm1401, %v1378, %v1417
    %v1434 = vsel %vm1402, %v1381, %v1418
    %v1435 = vsel %vm1403, %v1383, %v1419
    %v1436 = vsel %vm1404, %v1386, %v1420
    %v1437 = vsel %vm1405, %v1388, %v1421
    %v1438 = vperm.slane %v1169, 1
    %v1439 = vmul.f32 %v1422, %v1438
    %v1440 = vmul.f32 %v1423, %v1438
    %v1441 = vmul.f32 %v1424, %v1438
    %v1442 = vmul.f32 %v1425, %v1438
    %v1443 = vmul.f32 %v1426, %v1438
    %v1444 = vmul.f32 %v1427, %v1438
    %v1445 = vmul.f32 %v1428, %v1438
    %v1446 = vmul.f32 %v1429, %v1438
    %v1447 = vmul.f32 %v1430, %v1438
    %v1448 = vmul.f32 %v1431, %v1438
    %v1449 = vmul.f32 %v1432, %v1438
    %v1450 = vmul.f32 %v1433, %v1438
    %v1451 = vmul.f32 %v1434, %v1438
    %v1452 = vmul.f32 %v1435, %v1438
    %v1453 = vmul.f32 %v1436, %v1438
    %v1454 = vmul.f32 %v1437, %v1438
    %v1455 = vperm.slane %v1169, 2
    %v1456 = vadd.f32 %v1439, %v1455
    %v1457 = vadd.f32 %v1440, %v1455
    %v1458 = vadd.f32 %v1441, %v1455
    %v1459 = vadd.f32 %v1442, %v1455
    %v1460 = vadd.f32 %v1443, %v1455
    %v1461 = vadd.f32 %v1444, %v1455
    %v1462 = vadd.f32 %v1445, %v1455
    %v1463 = vadd.f32 %v1446, %v1455
    %v1464 = vadd.f32 %v1447, %v1455
    %v1465 = vadd.f32 %v1448, %v1455
    %v1466 = vadd.f32 %v1449, %v1455
    %v1467 = vadd.f32 %v1450, %v1455
    %v1468 = vadd.f32 %v1451, %v1455
    %v1469 = vadd.f32 %v1452, %v1455
    %v1470 = vadd.f32 %v1453, %v1455
    %v1471 = vadd.f32 %v1454, %v1455
    %v1472 = vunpack.c.l.bf16 %v1152
    %v1473 = vunpack.c.l.bf16 %v1153
    %v1474 = vunpack.c.l.bf16 %v1154
    %v1475 = vunpack.c.l.bf16 %v1155
    %v1476 = vunpack.c.l.bf16 %v1156
    %v1477 = vunpack.c.l.bf16 %v1157
    %v1478 = vunpack.c.l.bf16 %v1158
    %v1479 = vunpack.c.l.bf16 %v1159
    %v1480 = vunpack.c.l.bf16 %v1160
    %v1481 = vunpack.c.l.bf16 %v1161
    %v1482 = vunpack.c.l.bf16 %v1162
    %v1483 = vunpack.c.l.bf16 %v1163
    %v1484 = vunpack.c.l.bf16 %v1164
    %v1485 = vunpack.c.l.bf16 %v1165
    %v1486 = vunpack.c.l.bf16 %v1166
    %v1487 = vunpack.c.l.bf16 %v1167
    %v1488 = vadd.f32 %v1456, %v1472
    %v1489 = vadd.f32 %v1457, %v1473
    %v1490 = vadd.f32 %v1458, %v1474
    %v1491 = vadd.f32 %v1459, %v1475
    %v1492 = vadd.f32 %v1460, %v1476
    %v1493 = vadd.f32 %v1461, %v1477
    %v1494 = vadd.f32 %v1462, %v1478
    %v1495 = vadd.f32 %v1463, %v1479
    %v1496 = vadd.f32 %v1464, %v1480
    %v1497 = vadd.f32 %v1465, %v1481
    %v1498 = vadd.f32 %v1466, %v1482
    %v1499 = vadd.f32 %v1467, %v1483
    %v1500 = vadd.f32 %v1468, %v1484
    %v1501 = vadd.f32 %v1469, %v1485
    %v1502 = vadd.f32 %v1470, %v1486
    %v1503 = vadd.f32 %v1471, %v1487
    %v1504 = vpack.c.bf16 %v1488, %v1488
    %v1505 = vpack.c.bf16 %v1489, %v1489
    %v1506 = vpack.c.bf16 %v1490, %v1490
    %v1507 = vpack.c.bf16 %v1491, %v1491
    %v1508 = vpack.c.bf16 %v1492, %v1492
    %v1509 = vpack.c.bf16 %v1493, %v1493
    %v1510 = vpack.c.bf16 %v1494, %v1494
    %v1511 = vpack.c.bf16 %v1495, %v1495
    %v1512 = vpack.c.bf16 %v1496, %v1496
    %v1513 = vpack.c.bf16 %v1497, %v1497
    %v1514 = vpack.c.bf16 %v1498, %v1498
    %v1515 = vpack.c.bf16 %v1499, %v1499
    %v1516 = vpack.c.bf16 %v1500, %v1500
    %v1517 = vpack.c.bf16 %v1501, %v1501
    %v1518 = vpack.c.bf16 %v1502, %v1502
    %v1519 = vpack.c.bf16 %v1503, %v1503
    %s1520 = scalar_lea.vmem %s3, 16
    %v1521 = vld [vmem:[%s1520] sm:$0x7]
    %s1522 = scalar_lea.vmem [#allocation2], 256
    %v1523 = vld [vmem:[%s1522] sm:$0xf]
    %v1524 = vld [vmem:[%s1522 + $0x4] sm:$0xf]
    %v1525 = vld [vmem:[%s1522 + $0x8] sm:$0xf]
    %v1526 = vld [vmem:[%s1522 + $0xc] sm:$0xf]
    %v1527 = vld [vmem:[%s1522 + $0x10] sm:$0xf]
    %v1528 = vld [vmem:[%s1522 + $0x14] sm:$0xf]
    %v1529 = vld [vmem:[%s1522 + $0x18] sm:$0xf]
    %v1530 = vld [vmem:[%s1522 + $0x1c] sm:$0xf]
    %v1531 = vld [vmem:[%s1522 + $0x20] sm:$0xf]
    %v1532 = vld [vmem:[%s1522 + $0x24] sm:$0xf]
    %v1533 = vld [vmem:[%s1522 + $0x28] sm:$0xf]
    %v1534 = vld [vmem:[%s1522 + $0x2c] sm:$0xf]
    %v1535 = vld [vmem:[%s1522 + $0x30] sm:$0xf]
    %v1536 = vld [vmem:[%s1522 + $0x34] sm:$0xf]
    %v1537 = vld [vmem:[%s1522 + $0x38] sm:$0xf]
    %v1538 = vld [vmem:[%s1522 + $0x3c] sm:$0xf]
    %v1555 = vunpack.c.l.b16 %v1504
    %v1556 = vunpack.c.l.b16 %v1505
    %v1557 = vunpack.c.l.b16 %v1506
    %v1558 = vunpack.c.l.b16 %v1507
    %v1559 = vunpack.c.l.b16 %v1508
    %v1560 = vunpack.c.l.b16 %v1509
    %v1561 = vunpack.c.l.b16 %v1510
    %v1562 = vunpack.c.l.b16 %v1511
    %v1563 = vunpack.c.l.b16 %v1512
    %v1564 = vunpack.c.l.b16 %v1513
    %v1565 = vunpack.c.l.b16 %v1514
    %v1566 = vunpack.c.l.b16 %v1515
    %v1567 = vunpack.c.l.b16 %v1516
    %v1568 = vunpack.c.l.b16 %v1517
    %v1569 = vunpack.c.l.b16 %v1518
    %v1570 = vunpack.c.l.b16 %v1519
    %v1571 = vpack.c.b16 %v1556, %v1555
    %v1572 = vpack.c.b16 %v1558, %v1557
    %v1573 = vpack.c.b16 %v1560, %v1559
    %v1574 = vpack.c.b16 %v1562, %v1561
    %v1575 = vpack.c.b16 %v1564, %v1563
    %v1576 = vpack.c.b16 %v1566, %v1565
    %v1577 = vpack.c.b16 %v1568, %v1567
    %v1578 = vpack.c.b16 %v1570, %v1569
    %v1603 = vunpack.c.l.b16 %v1523
    %v1604 = vunpack.c.l.b16 %v1524
    %v1605 = vunpack.c.l.b16 %v1525
    %v1606 = vunpack.c.l.b16 %v1526
    %v1607 = vunpack.c.l.b16 %v1527
    %v1608 = vunpack.c.l.b16 %v1528
    %v1609 = vunpack.c.l.b16 %v1529
    %v1610 = vunpack.c.l.b16 %v1530
    %v1611 = vunpack.c.l.b16 %v1531
    %v1612 = vunpack.c.l.b16 %v1532
    %v1613 = vunpack.c.l.b16 %v1533
    %v1614 = vunpack.c.l.b16 %v1534
    %v1615 = vunpack.c.l.b16 %v1535
    %v1616 = vunpack.c.l.b16 %v1536
    %v1617 = vunpack.c.l.b16 %v1537
    %v1618 = vunpack.c.l.b16 %v1538
    %v1619 = vpack.c.b16 %v1604, %v1603
    %v1620 = vpack.c.b16 %v1606, %v1605
    %v1621 = vpack.c.b16 %v1608, %v1607
    %v1622 = vpack.c.b16 %v1610, %v1609
    %v1623 = vpack.c.b16 %v1612, %v1611
    %v1624 = vpack.c.b16 %v1614, %v1613
    %v1625 = vpack.c.b16 %v1616, %v1615
    %v1626 = vpack.c.b16 %v1618, %v1617
    %1635 = vmatpush.bf16.msra.mxu0 %v1626
    %1636 = vmatpush.bf16.msra.mxu0 %v1625
    %1637 = vmatpush.bf16.msra.mxu0 %v1624
    %1638 = vmatpush.bf16.msra.mxu0 %v1623
    %1639 = vmatpush.bf16.msra.mxu0 %v1622
    %1640 = vmatpush.bf16.msra.mxu0 %v1621
    %1641 = vmatpush.bf16.msra.mxu0 %v1620
    %1642 = vmatpush.bf16.msra.mxu0 %v1619
    %1643 = vmatmul.bf16.gmra.mxu0 %v1571
    %v1644 = vpop.f32.mrf.mxu0
    %v1645 = vadd.f32 0.0, %v1644
    %v1646 = vpop.f32.mrf.mxu0
    %v1647 = vadd.f32 0.0, %v1646
    %1648 = vmatmul.bf16.gmra.mxu0 %v1572
    %v1649 = vpop.f32.mrf.mxu0
    %v1650 = vadd.f32 0.0, %v1649
    %v1651 = vpop.f32.mrf.mxu0
    %v1652 = vadd.f32 0.0, %v1651
    %1653 = vmatmul.bf16.gmra.mxu0 %v1573
    %v1654 = vpop.f32.mrf.mxu0
    %v1655 = vadd.f32 0.0, %v1654
    %v1656 = vpop.f32.mrf.mxu0
    %v1657 = vadd.f32 0.0, %v1656
    %1658 = vmatmul.bf16.gmra.mxu0 %v1574
    %v1659 = vpop.f32.mrf.mxu0
    %v1660 = vadd.f32 0.0, %v1659
    %v1661 = vpop.f32.mrf.mxu0
    %v1662 = vadd.f32 0.0, %v1661
    %1663 = vmatmul.bf16.gmra.mxu0 %v1575
    %v1664 = vpop.f32.mrf.mxu0
    %v1665 = vadd.f32 0.0, %v1664
    %v1666 = vpop.f32.mrf.mxu0
    %v1667 = vadd.f32 0.0, %v1666
    %1668 = vmatmul.bf16.gmra.mxu0 %v1576
    %v1669 = vpop.f32.mrf.mxu0
    %v1670 = vadd.f32 0.0, %v1669
    %v1671 = vpop.f32.mrf.mxu0
    %v1672 = vadd.f32 0.0, %v1671
    %1673 = vmatmul.bf16.gmra.mxu0 %v1577
    %v1674 = vpop.f32.mrf.mxu0
    %v1675 = vadd.f32 0.0, %v1674
    %v1676 = vpop.f32.mrf.mxu0
    %v1677 = vadd.f32 0.0, %v1676
    %1678 = vmatmul.bf16.gmra.mxu0 %v1578
    %v1679 = vpop.f32.mrf.mxu0
    %v1680 = vadd.f32 0.0, %v1679
    %v1681 = vpop.f32.mrf.mxu0
    %v1682 = vadd.f32 0.0, %v1681
    %1683 = vdwg.mxu0
    %v1684 = vpack.c.bf16 %v1647, %v1645
    %v1685 = vpack.c.bf16 %v1652, %v1650
    %v1686 = vpack.c.bf16 %v1657, %v1655
    %v1687 = vpack.c.bf16 %v1662, %v1660
    %v1688 = vpack.c.bf16 %v1667, %v1665
    %v1689 = vpack.c.bf16 %v1672, %v1670
    %v1690 = vpack.c.bf16 %v1677, %v1675
    %v1691 = vpack.c.bf16 %v1682, %v1680
    %v1692 = vperm.slane %v1521, 0
    %1693 = vmatpush.bf16.msra.mxu0 %v1691
    %1694 = vmatpush.bf16.msra.mxu0 %v1690
    %1695 = vmatpush.bf16.msra.mxu0 %v1689
    %1696 = vmatpush.bf16.msra.mxu0 %v1688
    %1697 = vmatpush.bf16.msra.mxu0 %v1687
    %1698 = vmatpush.bf16.msra.mxu0 %v1686
    %1699 = vmatpush.bf16.msra.mxu0 %v1685
    %1700 = vmatpush.bf16.msra.mxu0 %v1684
    %1701 = vmatmul.bf16.gmra.mxu0 %v269
    %v1702 = vpop.f32.mrf.mxu0
    %v1703 = vadd.f32 %v1692, %v1702
    %v1704 = vpop.f32.mrf.mxu0
    %v1705 = vadd.f32 %v1692, %v1704
    %1706 = vmatmul.bf16.gmra.mxu0 %v270
    %v1707 = vpop.f32.mrf.mxu0
    %v1708 = vadd.f32 %v1692, %v1707
    %v1709 = vpop.f32.mrf.mxu0
    %v1710 = vadd.f32 %v1692, %v1709
    %1711 = vmatmul.bf16.gmra.mxu0 %v271
    %v1712 = vpop.f32.mrf.mxu0
    %v1713 = vadd.f32 %v1692, %v1712
    %v1714 = vpop.f32.mrf.mxu0
    %v1715 = vadd.f32 %v1692, %v1714
    %1716 = vmatmul.bf16.gmra.mxu0 %v272
    %v1717 = vpop.f32.mrf.mxu0
    %v1718 = vadd.f32 %v1692, %v1717
    %v1719 = vpop.f32.mrf.mxu0
    %v1720 = vadd.f32 %v1692, %v1719
    %1721 = vmatmul.bf16.gmra.mxu0 %v273
    %v1722 = vpop.f32.mrf.mxu0
    %v1723 = vadd.f32 %v1692, %v1722
    %v1724 = vpop.f32.mrf.mxu0
    %v1725 = vadd.f32 %v1692, %v1724
    %1726 = vmatmul.bf16.gmra.mxu0 %v274
    %v1727 = vpop.f32.mrf.mxu0
    %v1728 = vadd.f32 %v1692, %v1727
    %v1729 = vpop.f32.mrf.mxu0
    %v1730 = vadd.f32 %v1692, %v1729
    %1731 = vmatmul.bf16.gmra.mxu0 %v275
    %v1732 = vpop.f32.mrf.mxu0
    %v1733 = vadd.f32 %v1692, %v1732
    %v1734 = vpop.f32.mrf.mxu0
    %v1735 = vadd.f32 %v1692, %v1734
    %1736 = vmatmul.bf16.gmra.mxu0 %v276
    %v1737 = vpop.f32.mrf.mxu0
    %v1738 = vadd.f32 %v1692, %v1737
    %v1739 = vpop.f32.mrf.mxu0
    %v1740 = vadd.f32 %v1692, %v1739
    %1741 = vdwg.mxu0
    %vm1742 = vcmp.gt.f32.partialorder %v1703, 0.0
    %vm1743 = vcmp.gt.f32.partialorder %v1705, 0.0
    %vm1744 = vcmp.gt.f32.partialorder %v1708, 0.0
    %vm1745 = vcmp.gt.f32.partialorder %v1710, 0.0
    %vm1746 = vcmp.gt.f32.partialorder %v1713, 0.0
    %vm1747 = vcmp.gt.f32.partialorder %v1715, 0.0
    %vm1748 = vcmp.gt.f32.partialorder %v1718, 0.0
    %vm1749 = vcmp.gt.f32.partialorder %v1720, 0.0
    %vm1750 = vcmp.gt.f32.partialorder %v1723, 0.0
    %vm1751 = vcmp.gt.f32.partialorder %v1725, 0.0
    %vm1752 = vcmp.gt.f32.partialorder %v1728, 0.0
    %vm1753 = vcmp.gt.f32.partialorder %v1730, 0.0
    %vm1754 = vcmp.gt.f32.partialorder %v1733, 0.0
    %vm1755 = vcmp.gt.f32.partialorder %v1735, 0.0
    %vm1756 = vcmp.gt.f32.partialorder %v1738, 0.0
    %vm1757 = vcmp.gt.f32.partialorder %v1740, 0.0
    %v1758 = vmul.f32 %v1703, 0.2
    %v1759 = vmul.f32 %v1705, 0.2
    %v1760 = vmul.f32 %v1708, 0.2
    %v1761 = vmul.f32 %v1710, 0.2
    %v1762 = vmul.f32 %v1713, 0.2
    %v1763 = vmul.f32 %v1715, 0.2
    %v1764 = vmul.f32 %v1718, 0.2
    %v1765 = vmul.f32 %v1720, 0.2
    %v1766 = vmul.f32 %v1723, 0.2
    %v1767 = vmul.f32 %v1725, 0.2
    %v1768 = vmul.f32 %v1728, 0.2
    %v1769 = vmul.f32 %v1730, 0.2
    %v1770 = vmul.f32 %v1733, 0.2
    %v1771 = vmul.f32 %v1735, 0.2
    %v1772 = vmul.f32 %v1738, 0.2
    %v1773 = vmul.f32 %v1740, 0.2
    %v1774 = vsel %vm1742, %v1703, %v1758
    %v1775 = vsel %vm1743, %v1705, %v1759
    %v1776 = vsel %vm1744, %v1708, %v1760
    %v1777 = vsel %vm1745, %v1710, %v1761
    %v1778 = vsel %vm1746, %v1713, %v1762
    %v1779 = vsel %vm1747, %v1715, %v1763
    %v1780 = vsel %vm1748, %v1718, %v1764
    %v1781 = vsel %vm1749, %v1720, %v1765
    %v1782 = vsel %vm1750, %v1723, %v1766
    %v1783 = vsel %vm1751, %v1725, %v1767
    %v1784 = vsel %vm1752, %v1728, %v1768
    %v1785 = vsel %vm1753, %v1730, %v1769
    %v1786 = vsel %vm1754, %v1733, %v1770
    %v1787 = vsel %vm1755, %v1735, %v1771
    %v1788 = vsel %vm1756, %v1738, %v1772
    %v1789 = vsel %vm1757, %v1740, %v1773
    %v1790 = vperm.slane %v1521, 1
    %v1791 = vmul.f32 %v1774, %v1790
    %v1792 = vmul.f32 %v1775, %v1790
    %v1793 = vmul.f32 %v1776, %v1790
    %v1794 = vmul.f32 %v1777, %v1790
    %v1795 = vmul.f32 %v1778, %v1790
    %v1796 = vmul.f32 %v1779, %v1790
    %v1797 = vmul.f32 %v1780, %v1790
    %v1798 = vmul.f32 %v1781, %v1790
    %v1799 = vmul.f32 %v1782, %v1790
    %v1800 = vmul.f32 %v1783, %v1790
    %v1801 = vmul.f32 %v1784, %v1790
    %v1802 = vmul.f32 %v1785, %v1790
    %v1803 = vmul.f32 %v1786, %v1790
    %v1804 = vmul.f32 %v1787, %v1790
    %v1805 = vmul.f32 %v1788, %v1790
    %v1806 = vmul.f32 %v1789, %v1790
    %v1807 = vperm.slane %v1521, 2
    %v1808 = vadd.f32 %v1791, %v1807
    %v1809 = vadd.f32 %v1792, %v1807
    %v1810 = vadd.f32 %v1793, %v1807
    %v1811 = vadd.f32 %v1794, %v1807
    %v1812 = vadd.f32 %v1795, %v1807
    %v1813 = vadd.f32 %v1796, %v1807
    %v1814 = vadd.f32 %v1797, %v1807
    %v1815 = vadd.f32 %v1798, %v1807
    %v1816 = vadd.f32 %v1799, %v1807
    %v1817 = vadd.f32 %v1800, %v1807
    %v1818 = vadd.f32 %v1801, %v1807
    %v1819 = vadd.f32 %v1802, %v1807
    %v1820 = vadd.f32 %v1803, %v1807
    %v1821 = vadd.f32 %v1804, %v1807
    %v1822 = vadd.f32 %v1805, %v1807
    %v1823 = vadd.f32 %v1806, %v1807
    %v1824 = vunpack.c.l.bf16 %v1504
    %v1825 = vunpack.c.l.bf16 %v1505
    %v1826 = vunpack.c.l.bf16 %v1506
    %v1827 = vunpack.c.l.bf16 %v1507
    %v1828 = vunpack.c.l.bf16 %v1508
    %v1829 = vunpack.c.l.bf16 %v1509
    %v1830 = vunpack.c.l.bf16 %v1510
    %v1831 = vunpack.c.l.bf16 %v1511
    %v1832 = vunpack.c.l.bf16 %v1512
    %v1833 = vunpack.c.l.bf16 %v1513
    %v1834 = vunpack.c.l.bf16 %v1514
    %v1835 = vunpack.c.l.bf16 %v1515
    %v1836 = vunpack.c.l.bf16 %v1516
    %v1837 = vunpack.c.l.bf16 %v1517
    %v1838 = vunpack.c.l.bf16 %v1518
    %v1839 = vunpack.c.l.bf16 %v1519
    %v1840 = vadd.f32 %v1808, %v1824
    %v1841 = vadd.f32 %v1809, %v1825
    %v1842 = vadd.f32 %v1810, %v1826
    %v1843 = vadd.f32 %v1811, %v1827
    %v1844 = vadd.f32 %v1812, %v1828
    %v1845 = vadd.f32 %v1813, %v1829
    %v1846 = vadd.f32 %v1814, %v1830
    %v1847 = vadd.f32 %v1815, %v1831
    %v1848 = vadd.f32 %v1816, %v1832
    %v1849 = vadd.f32 %v1817, %v1833
    %v1850 = vadd.f32 %v1818, %v1834
    %v1851 = vadd.f32 %v1819, %v1835
    %v1852 = vadd.f32 %v1820, %v1836
    %v1853 = vadd.f32 %v1821, %v1837
    %v1854 = vadd.f32 %v1822, %v1838
    %v1855 = vadd.f32 %v1823, %v1839
    %v1856 = vpack.c.bf16 %v1841, %v1840
    %v1857 = vpack.c.bf16 %v1843, %v1842
    %v1858 = vpack.c.bf16 %v1845, %v1844
    %v1859 = vpack.c.bf16 %v1847, %v1846
    %v1860 = vpack.c.bf16 %v1849, %v1848
    %v1861 = vpack.c.bf16 %v1851, %v1850
    %v1862 = vpack.c.bf16 %v1853, %v1852
    %v1863 = vpack.c.bf16 %v1855, %v1854
    %s1864 = scalar_lea.vmem [#allocation2], 320
    %v1865 = vld [vmem:[%s1864] sm:$0xf]
    %v1866 = vld [vmem:[%s1864 + $0x4] sm:$0xf]
    %v1867 = vld [vmem:[%s1864 + $0x8] sm:$0xf]
    %v1868 = vld [vmem:[%s1864 + $0xc] sm:$0xf]
    %v1869 = vld [vmem:[%s1864 + $0x10] sm:$0xf]
    %v1870 = vld [vmem:[%s1864 + $0x14] sm:$0xf]
    %v1871 = vld [vmem:[%s1864 + $0x18] sm:$0xf]
    %v1872 = vld [vmem:[%s1864 + $0x1c] sm:$0xf]
    %v1873 = vld [vmem:[%s1864 + $0x20] sm:$0xf]
    %v1874 = vld [vmem:[%s1864 + $0x24] sm:$0xf]
    %v1875 = vld [vmem:[%s1864 + $0x28] sm:$0xf]
    %v1876 = vld [vmem:[%s1864 + $0x2c] sm:$0xf]
    %v1877 = vld [vmem:[%s1864 + $0x30] sm:$0xf]
    %v1878 = vld [vmem:[%s1864 + $0x34] sm:$0xf]
    %v1879 = vld [vmem:[%s1864 + $0x38] sm:$0xf]
    %v1880 = vld [vmem:[%s1864 + $0x3c] sm:$0xf]
    %v1897 = vunpack.c.l.b16 %v1865
    %v1898 = vunpack.c.l.b16 %v1866
    %v1899 = vunpack.c.l.b16 %v1867
    %v1900 = vunpack.c.l.b16 %v1868
    %v1901 = vunpack.c.l.b16 %v1869
    %v1902 = vunpack.c.l.b16 %v1870
    %v1903 = vunpack.c.l.b16 %v1871
    %v1904 = vunpack.c.l.b16 %v1872
    %v1905 = vunpack.c.l.b16 %v1873
    %v1906 = vunpack.c.l.b16 %v1874
    %v1907 = vunpack.c.l.b16 %v1875
    %v1908 = vunpack.c.l.b16 %v1876
    %v1909 = vunpack.c.l.b16 %v1877
    %v1910 = vunpack.c.l.b16 %v1878
    %v1911 = vunpack.c.l.b16 %v1879
    %v1912 = vunpack.c.l.b16 %v1880
    %v1913 = vpack.c.b16 %v1898, %v1897
    %v1914 = vpack.c.b16 %v1900, %v1899
    %v1915 = vpack.c.b16 %v1902, %v1901
    %v1916 = vpack.c.b16 %v1904, %v1903
    %v1917 = vpack.c.b16 %v1906, %v1905
    %v1918 = vpack.c.b16 %v1908, %v1907
    %v1919 = vpack.c.b16 %v1910, %v1909
    %v1920 = vpack.c.b16 %v1912, %v1911
    %1929 = vmatpush.bf16.msra.mxu0 %v1920
    %1930 = vmatpush.bf16.msra.mxu0 %v1919
    %1931 = vmatpush.bf16.msra.mxu0 %v1918
    %1932 = vmatpush.bf16.msra.mxu0 %v1917
    %1933 = vmatpush.bf16.msra.mxu0 %v1916
    %1934 = vmatpush.bf16.msra.mxu0 %v1915
    %1935 = vmatpush.bf16.msra.mxu0 %v1914
    %1936 = vmatpush.bf16.msra.mxu0 %v1913
    %1937 = vmatmul.bf16.gmra.mxu0 %v1856
    %v1938 = vpop.f32.mrf.mxu0
    %v1939 = vadd.f32 0.0, %v1938
    %v1940 = vpop.f32.mrf.mxu0
    %v1941 = vadd.f32 0.0, %v1940
    %1942 = vmatmul.bf16.gmra.mxu0 %v1857
    %v1943 = vpop.f32.mrf.mxu0
    %v1944 = vadd.f32 0.0, %v1943
    %v1945 = vpop.f32.mrf.mxu0
    %v1946 = vadd.f32 0.0, %v1945
    %1947 = vmatmul.bf16.gmra.mxu0 %v1858
    %v1948 = vpop.f32.mrf.mxu0
    %v1949 = vadd.f32 0.0, %v1948
    %v1950 = vpop.f32.mrf.mxu0
    %v1951 = vadd.f32 0.0, %v1950
    %1952 = vmatmul.bf16.gmra.mxu0 %v1859
    %v1953 = vpop.f32.mrf.mxu0
    %v1954 = vadd.f32 0.0, %v1953
    %v1955 = vpop.f32.mrf.mxu0
    %v1956 = vadd.f32 0.0, %v1955
    %1957 = vmatmul.bf16.gmra.mxu0 %v1860
    %v1958 = vpop.f32.mrf.mxu0
    %v1959 = vadd.f32 0.0, %v1958
    %v1960 = vpop.f32.mrf.mxu0
    %v1961 = vadd.f32 0.0, %v1960
    %1962 = vmatmul.bf16.gmra.mxu0 %v1861
    %v1963 = vpop.f32.mrf.mxu0
    %v1964 = vadd.f32 0.0, %v1963
    %v1965 = vpop.f32.mrf.mxu0
    %v1966 = vadd.f32 0.0, %v1965
    %1967 = vmatmul.bf16.gmra.mxu0 %v1862
    %v1968 = vpop.f32.mrf.mxu0
    %v1969 = vadd.f32 0.0, %v1968
    %v1970 = vpop.f32.mrf.mxu0
    %v1971 = vadd.f32 0.0, %v1970
    %1972 = vmatmul.bf16.gmra.mxu0 %v1863
    %v1973 = vpop.f32.mrf.mxu0
    %v1974 = vadd.f32 0.0, %v1973
    %v1975 = vpop.f32.mrf.mxu0
    %v1976 = vadd.f32 0.0, %v1975
    %1977 = vdwg.mxu0
    %v1978 = vpack.c.bf16 %v1941, %v1939
    %v1979 = vpack.c.bf16 %v1946, %v1944
    %v1980 = vpack.c.bf16 %v1951, %v1949
    %v1981 = vpack.c.bf16 %v1956, %v1954
    %v1982 = vpack.c.bf16 %v1961, %v1959
    %v1983 = vpack.c.bf16 %v1966, %v1964
    %v1984 = vpack.c.bf16 %v1971, %v1969
    %v1985 = vpack.c.bf16 %v1976, %v1974
    %s1986 = scalar_lea.vmem %s3, 20
    %v1987 = vld [vmem:[%s1986] sm:$0x7]
    %v1988 = vperm.slane %v1987, 0
    %1989 = vmatpush.bf16.msra.mxu0 %v1985
    %1990 = vmatpush.bf16.msra.mxu0 %v1984
    %1991 = vmatpush.bf16.msra.mxu0 %v1983
    %1992 = vmatpush.bf16.msra.mxu0 %v1982
    %1993 = vmatpush.bf16.msra.mxu0 %v1981
    %1994 = vmatpush.bf16.msra.mxu0 %v1980
    %1995 = vmatpush.bf16.msra.mxu0 %v1979
    %1996 = vmatpush.bf16.msra.mxu0 %v1978
    %1997 = vmatmul.bf16.gmra.mxu0 %v269
    %v1998 = vpop.f32.mrf.mxu0
    %v1999 = vadd.f32 %v1988, %v1998
    %v2000 = vpop.f32.mrf.mxu0
    %v2001 = vadd.f32 %v1988, %v2000
    %2002 = vmatmul.bf16.gmra.mxu0 %v270
    %v2003 = vpop.f32.mrf.mxu0
    %v2004 = vadd.f32 %v1988, %v2003
    %v2005 = vpop.f32.mrf.mxu0
    %v2006 = vadd.f32 %v1988, %v2005
    %2007 = vmatmul.bf16.gmra.mxu0 %v271
    %v2008 = vpop.f32.mrf.mxu0
    %v2009 = vadd.f32 %v1988, %v2008
    %v2010 = vpop.f32.mrf.mxu0
    %v2011 = vadd.f32 %v1988, %v2010
    %2012 = vmatmul.bf16.gmra.mxu0 %v272
    %v2013 = vpop.f32.mrf.mxu0
    %v2014 = vadd.f32 %v1988, %v2013
    %v2015 = vpop.f32.mrf.mxu0
    %v2016 = vadd.f32 %v1988, %v2015
    %2017 = vmatmul.bf16.gmra.mxu0 %v273
    %v2018 = vpop.f32.mrf.mxu0
    %v2019 = vadd.f32 %v1988, %v2018
    %v2020 = vpop.f32.mrf.mxu0
    %v2021 = vadd.f32 %v1988, %v2020
    %2022 = vmatmul.bf16.gmra.mxu0 %v274
    %v2023 = vpop.f32.mrf.mxu0
    %v2024 = vadd.f32 %v1988, %v2023
    %v2025 = vpop.f32.mrf.mxu0
    %v2026 = vadd.f32 %v1988, %v2025
    %2027 = vmatmul.bf16.gmra.mxu0 %v275
    %v2028 = vpop.f32.mrf.mxu0
    %v2029 = vadd.f32 %v1988, %v2028
    %v2030 = vpop.f32.mrf.mxu0
    %v2031 = vadd.f32 %v1988, %v2030
    %2032 = vmatmul.bf16.gmra.mxu0 %v276
    %v2033 = vpop.f32.mrf.mxu0
    %v2034 = vadd.f32 %v1988, %v2033
    %v2035 = vpop.f32.mrf.mxu0
    %v2036 = vadd.f32 %v1988, %v2035
    %2037 = vdwg.mxu0
    %2038 = vst [vmem:[#allocation5] sm:$0xff] %v1999
    %2039 = vst [vmem:[#allocation5 + $0x8] sm:$0xff] %v2001
    %2040 = vst [vmem:[#allocation5 + $0x10] sm:$0xff] %v2004
    %2041 = vst [vmem:[#allocation5 + $0x18] sm:$0xff] %v2006
    %2042 = vst [vmem:[#allocation5 + $0x20] sm:$0xff] %v2009
    %2043 = vst [vmem:[#allocation5 + $0x28] sm:$0xff] %v2011
    %2044 = vst [vmem:[#allocation5 + $0x30] sm:$0xff] %v2014
    %2045 = vst [vmem:[#allocation5 + $0x38] sm:$0xff] %v2016
    %2046 = vst [vmem:[#allocation5 + $0x40] sm:$0xff] %v2019
    %2047 = vst [vmem:[#allocation5 + $0x48] sm:$0xff] %v2021
    %2048 = vst [vmem:[#allocation5 + $0x50] sm:$0xff] %v2024
    %2049 = vst [vmem:[#allocation5 + $0x58] sm:$0xff] %v2026
    %2050 = vst [vmem:[#allocation5 + $0x60] sm:$0xff] %v2029
    %2051 = vst [vmem:[#allocation5 + $0x68] sm:$0xff] %v2031
    %2052 = vst [vmem:[#allocation5 + $0x70] sm:$0xff] %v2034
    %2053 = vst [vmem:[#allocation5 + $0x78] sm:$0xff] %v2036
    // Predicated region
    $region22: #{_fused_forward.1} parent=1 // pred_check
      _
    $region23: #{_fused_forward.1} parent=1 // pred_check_branch
      %2055 = sbr.rel (0) target = $region25
    $region24: #{_fused_forward.1} parent=1 // pred_region
      %2057 = vsyncadd [#allocation4], 0
      %s2058 = sshll.u32 [#allocation5], 4
      %s2059 = int_to_ptr.vmem [resolvable:$true] %s2058
      %s2060 = sshll.u32 %s4, 4
      %s2061 = int_to_ptr.hbm [resolvable:$true] %s2060
      %2066 = dma.vmem_to_hbm [thread:$0]  %s2059, 2048, %s2061, [#allocation4], 128, 128, 8
    $region25: #{_fused_forward.1} parent=1 // pred_fallthru
      _
    // Predicated region
    $region26: #{_fused_forward.1} parent=1 // pred_check
      _
    $region27: #{_fused_forward.1} parent=1 // pred_check_branch
      %2068 = sbr.rel (0) target = $region29
    $region28: #{_fused_forward.1} parent=1 // pred_region
      %2070 = dma.done [#allocation4], 2048
    $region29: #{_fused_forward.1} parent=1 // pred_fallthru
      _
    %2071 = vsyncpa [#allocation3], 1
    %2072 = vsyncpa [#allocation4], 1

</llo_original>
